<compile_context>
chip_gen: v7x
topology: tpu7x:2x2x1
jax: 0.10.0
libtpu: 0.0.40
codegen_flags: <defaults>
</compile_context>

<pallas_src>
import jax
import jax.numpy as jnp
from jax.experimental import pallas as pl
from jax.experimental.pallas import tpu as pltpu

KPOOL = 31
RAD = 15  # padding = (KPOOL - 1) // 2
_INV_AREA = 1.0 / float(KPOOL * KPOOL)


def _band(n, rad, dtype):
    """Banded 0/1 matrix: band[i, j] = 1 iff |i - j| <= rad."""
    i = jnp.arange(n, dtype=jnp.int32)
    return (jnp.abs(i[:, None] - i[None, :]) <= rad).astype(dtype)


def _vmem_config():
    """(vmem_limit_bytes, enforce >=2 grid steps) gated on chip generation."""
    try:
        info = pltpu.get_tpu_info()
        cap = int(getattr(info, "vmem_capacity_bytes", 64 << 20))
    except Exception:
        cap = 64 << 20                       # conservative (v7x-sized) fallback
    if cap >= (100 << 20):                   # v5e / v6e: 128 MiB VMEM, single TC
        return 96 << 20, False
    return 40 << 20, True                    # v7x: 64 MiB per TC, dual TC


def _choose_plane_batch(P, Hp, Wp, vmem_budget_bytes, keep_two_steps):
    """Planes per grid step: fill the MXU M dimension, amortize the ~0.35us
    per-step overhead, and stay inside the real per-chip VMEM budget."""
    plane_bytes = Hp * Wp * 4
    # Per-plane resident bytes: 2 inputs x 2 pipeline buffers + pooled row.
    per_plane = plane_bytes * 5
    # Fixed resident bytes: band_w + band_h + valid + ~10 elementwise temps.
    fixed = (Wp * Wp + Hp * Hp + Hp * Wp) * 4 + 10 * plane_bytes
    avail = max(per_plane, vmem_budget_bytes - fixed)
    cap = max(1, avail // per_plane)
    target = max(8, -(-1024 // Hp))          # aim for ~1024 MXU rows per step
    B = int(max(1, min(P, target, cap)))
    if keep_two_steps and P > 1:
        B = min(B, -(-P // 2))               # >=2 grid steps for dual-TC v7x
    return B


def _make_kernel(B, has_valid):
    def kernel(*refs):
        if has_valid:
            pred_ref, mask_ref, bandh_ref, bandw_ref, valid_ref, out_ref = refs
        else:
            pred_ref, mask_ref, bandh_ref, bandw_ref, out_ref = refs
            valid_ref = None

        p = pred_ref[...]        # (B, Hp, Wp) f32 logits
        m = mask_ref[...]        # (B, Hp, Wp) f32 targets in [0, 1]
        bh = bandh_ref[...]      # (Hp, Hp) f32 vertical 31-window band
        bw = bandw_ref[...]      # (Wp, Wp) f32 horizontal 31-window band
        valid = valid_ref[...] if has_valid else None

        Bc, Hp, Wp = p.shape

        # Horizontal window for all planes at once: one (B*Hp, Wp) x (Wp, Wp)
        # MXU matmul (fills the M dimension). Kept in f32 (exact for soft masks).
        row = jnp.dot(m.reshape(Bc * Hp, Wp), bw,
                      preferred_element_type=jnp.float32).reshape(Bc, Hp, Wp)

        lane = jax.lax.broadcasted_iota(jnp.int32, (1, Bc), 1)
        result = jnp.zeros((1, Bc), jnp.float32)

        for b in range(Bc):
            # Vertical window for plane b (MXU). Independent of the elementwise
            # work of other planes, so the scheduler overlaps MXU and VPU slots.
            pooled = jnp.dot(bh, row[b],
                             preferred_element_type=jnp.float32) * _INV_AREA
            pb = p[b]
            mb = m[b]

            # weight; padded pixels masked out so they never bias the loss.
            w = 1.0 + 5.0 * jnp.abs(pooled - mb)
            if has_valid:
                w = w * valid

            # BCE-with-logits and sigmoid-free IoU sharing one exp() per pixel.
            e = jnp.exp(-jnp.abs(pb))                              # EUP, once
            bce = jnp.maximum(pb, 0.0) - pb * mb + jnp.log(1.0 + e)

            one_e = 1.0 + e
            f = jnp.where(pb >= 0.0, 1.0, e)                       # sigmoid = f/one_e
            num_i = f * mb + one_e                                 # (inter+1)*(1+e)
            den_i = f * (1.0 - mb) + (1.0 + mb) * one_e            # (union-inter+1)*(1+e)
            rd = pl.reciprocal(den_i, approx=True)                 # single EUP rcp
            rd = rd * (2.0 - den_i * rd)                           # one Newton step
            iou = 1.0 - num_i * rd

            # Fused weighted reductions -> one scalar per plane.
            num = jnp.sum(jnp.sum(w * (bce + iou), axis=-1, keepdims=True),
                          axis=0, keepdims=True)                   # (1, 1)
            den = jnp.sum(jnp.sum(w, axis=-1, keepdims=True),
                          axis=0, keepdims=True)                   # (1, 1)
            result = jnp.where(lane == b, num / den, result)

        out_ref[...] = result.reshape(1, 1, Bc).astype(out_ref.dtype)

    return kernel


def bce_iou_loss(pred, mask):
    assert pred.shape == mask.shape and pred.ndim == 4
    N, C, H, W = pred.shape
    P = N * C
    Hp = -(-H // 8) * 8        # sublane multiple
    Wp = -(-W // 128) * 128    # lane multiple
    has_valid = (Hp != H) or (Wp != W)

    vmem_limit, keep_two_steps = _vmem_config()
    B = _choose_plane_batch(P, Hp, Wp, int(vmem_limit * 0.85), keep_two_steps)
    G = -(-P // B)
    Ppad = G * B

    pred_f = jnp.pad(pred.astype(jnp.float32).reshape(P, H, W),
                     ((0, Ppad - P), (0, Hp - H), (0, Wp - W)))
    mask_f = jnp.pad(mask.astype(jnp.float32).reshape(P, H, W),
                     ((0, Ppad - P), (0, Hp - H), (0, Wp - W)))

    band_h = _band(Hp, RAD, jnp.float32)    # built once in the wrapper
    band_w = _band(Wp, RAD, jnp.float32)

    in_specs = [
        pl.BlockSpec((B, Hp, Wp), lambda g: (g, 0, 0)),
        pl.BlockSpec((B, Hp, Wp), lambda g: (g, 0, 0)),
        pl.BlockSpec((Hp, Hp), lambda g: (0, 0)),   # constant index -> resident
        pl.BlockSpec((Wp, Wp), lambda g: (0, 0)),   # constant index -> resident
    ]
    args = [pred_f, mask_f, band_h, band_w]
    if has_valid:
        valid = ((jnp.arange(Hp)[:, None] < H) &
                 (jnp.arange(Wp)[None, :] < W)).astype(jnp.float32)
        in_specs.append(pl.BlockSpec((Hp, Wp), lambda g: (0, 0)))
        args.append(valid)

    per_plane = pl.pallas_call(
        _make_kernel(B, has_valid),
        out_shape=jax.ShapeDtypeStruct((G, 1, B), jnp.float32),
        grid=(G,),
        in_specs=in_specs,
        out_specs=pl.BlockSpec((1, 1, B), lambda g: (g, 0, 0)),
        compiler_params=pltpu.CompilerParams(
            dimension_semantics=("parallel",),
            vmem_limit_bytes=int(vmem_limit)),
    )(*args)

    # (weighted_bce + weighted_iou).mean() over the real N*C planes.
    return jnp.mean(per_plane.reshape(-1)[:P])


def bce_iou_loss_ref(pred, mask):
    """Pure-JAX reference mirroring the PyTorch module."""
    C = mask.shape[1]
    k = jnp.ones((C, 1, KPOOL, KPOOL), jnp.float32) / float(KPOOL * KPOOL)
    pooled = jax.lax.conv_general_dilated(
        mask, k, window_strides=(1, 1), padding=((RAD, RAD), (RAD, RAD)),
        dimension_numbers=("NCHW", "OIHW", "NCHW"), feature_group_count=C)
    weight = 1.0 + 5.0 * jnp.abs(pooled - mask)
    bce = jnp.maximum(pred, 0.0) - pred * mask + jnp.log(1.0 + jnp.exp(-jnp.abs(pred)))
    s = jax.nn.sigmoid(pred)
    inter = s * mask
    union = s + mask
    iou = 1.0 - (inter + 1.0) / (union - inter + 1.0)
    wb = (weight * bce).sum(axis=(2, 3)) / weight.sum(axis=(2, 3))
    wi = (weight * iou).sum(axis=(2, 3)) / weight.sum(axis=(2, 3))
    return (wb + wi).mean()


if __name__ == "__main__":
    key = jax.random.PRNGKey(0)

    # Case 1: the module's nominal small shape (soft targets, spatial padding).
    kp, km, key = jax.random.split(key, 3)
    N, C, H, W = 2, 4, 16, 16
    pred = jax.random.normal(kp, (N, C, H, W), dtype=jnp.float32)    # logits
    mask = jax.random.uniform(km, (N, C, H, W), dtype=jnp.float32)   # soft targets
    loss = jax.block_until_ready(bce_iou_loss(pred, mask))
    ref = jax.block_until_ready(bce_iou_loss_ref(pred, mask))
    assert jnp.isfinite(loss), "non-finite loss (case 1)"
    assert jnp.abs(loss - ref) < 2e-3, f"mismatch (case 1): kernel={loss} ref={ref}"

    # Case 2: odd plane count + non-lane-aligned width (exercises plane padding).
    kp2, km2 = jax.random.split(key)
    N2, C2, H2, W2 = 1, 3, 16, 40
    pred2 = jax.random.normal(kp2, (N2, C2, H2, W2), dtype=jnp.float32)
    mask2 = (jax.random.uniform(km2, (N2, C2, H2, W2)) > 0.5).astype(jnp.float32)
    loss2 = jax.block_until_ready(bce_iou_loss(pred2, mask2))
    ref2 = jax.block_until_ready(bce_iou_loss_ref(pred2, mask2))
    assert jnp.isfinite(loss2), "non-finite loss (case 2)"
    assert jnp.abs(loss2 - ref2) < 2e-3, f"mismatch (case 2): kernel={loss2} ref={ref2}"

    print("KERNEL_OK")
</pallas_src>

<mosaic_0001>
module attributes {stable_mosaic.version = 11 : i64} {
  func.func @kernel(%arg0: i32, %arg1: memref<4x16x128xf32, #tpu.memory_space<vmem>>, %arg2: memref<4x16x128xf32, #tpu.memory_space<vmem>>, %arg3: memref<16x16xf32, #tpu.memory_space<vmem>>, %arg4: memref<128x128xf32, #tpu.memory_space<vmem>>, %arg5: memref<16x128xf32, #tpu.memory_space<vmem>>, %arg6: memref<1x1x4xf32, #tpu.memory_space<vmem>>) attributes {dimension_semantics = [#tpu.dimension_semantics<parallel>], iteration_bounds = array<i64: 2>, scalar_prefetch = 0 : i64, scratch_operands = 0 : i64, tpu.core_type = #tpu.core_type<tc>, window_params = [{transform_indices = @transform_0, window_bounds = array<i64: 4, 16, 128>}, {transform_indices = @transform_1, window_bounds = array<i64: 4, 16, 128>}, {pipeline_mode = #tpu.pipeline_mode<synchronous>, transform_indices = @transform_2, window_bounds = array<i64: 16, 16>}, {pipeline_mode = #tpu.pipeline_mode<synchronous>, transform_indices = @transform_3, window_bounds = array<i64: 128, 128>}, {pipeline_mode = #tpu.pipeline_mode<synchronous>, transform_indices = @transform_4, window_bounds = array<i64: 16, 128>}, {transform_indices = @transform_5, window_bounds = array<i64: 1, 1, 4>}]} {
    %c0 = arith.constant 0 : index
    %c0_0 = arith.constant 0 : index
    %c0_1 = arith.constant 0 : index
    %0 = vector.load %arg1[%c0, %c0_0, %c0_1] : memref<4x16x128xf32, #tpu.memory_space<vmem>>, vector<4x16x128xf32>
    %c0_2 = arith.constant 0 : index
    %c0_3 = arith.constant 0 : index
    %c0_4 = arith.constant 0 : index
    %1 = vector.load %arg2[%c0_2, %c0_3, %c0_4] : memref<4x16x128xf32, #tpu.memory_space<vmem>>, vector<4x16x128xf32>
    %c0_5 = arith.constant 0 : index
    %c0_6 = arith.constant 0 : index
    %2 = vector.load %arg3[%c0_5, %c0_6] : memref<16x16xf32, #tpu.memory_space<vmem>>, vector<16x16xf32>
    %c0_7 = arith.constant 0 : index
    %c0_8 = arith.constant 0 : index
    %3 = vector.load %arg4[%c0_7, %c0_8] : memref<128x128xf32, #tpu.memory_space<vmem>>, vector<128x128xf32>
    %c0_9 = arith.constant 0 : index
    %c0_10 = arith.constant 0 : index
    %4 = vector.load %arg5[%c0_9, %c0_10] : memref<16x128xf32, #tpu.memory_space<vmem>>, vector<16x128xf32>
    %5 = vector.shape_cast %1 : vector<4x16x128xf32> to vector<64x128xf32>
    %cst = arith.constant dense<0.000000e+00> : vector<64x128xf32>
    %6 = tpu.matmul %5, %3, %cst {dimension_numbers = #tpu.dot_dimension_numbers<[1], [0], [0], [1], [0, 0, 1, 1], [], []>} : vector<64x128xf32>, vector<128x128xf32>, vector<64x128xf32> -> vector<64x128xf32>
    %7 = vector.shape_cast %6 : vector<64x128xf32> to vector<4x16x128xf32>
    %8 = tpu.iota {dimensions = array<i32: 1>} : vector<1x4xi32>
    %cst_11 = arith.constant 0.000000e+00 : f32
    %9 = vector.broadcast %cst_11 : f32 to vector<1x4xf32>
    %10 = vector.extract_strided_slice %7 {offsets = [0, 0, 0], sizes = [1, 16, 128], strides = [1, 1, 1]} : vector<4x16x128xf32> to vector<1x16x128xf32>
    %11 = vector.shape_cast %10 : vector<1x16x128xf32> to vector<16x128xf32>
    %cst_12 = arith.constant dense<0.000000e+00> : vector<16x128xf32>
    %12 = tpu.matmul %2, %11, %cst_12 {dimension_numbers = #tpu.dot_dimension_numbers<[1], [0], [0], [1], [0, 0, 1, 1], [], []>} : vector<16x16xf32>, vector<16x128xf32>, vector<16x128xf32> -> vector<16x128xf32>
    %cst_13 = arith.constant 0.00104058278 : f32
    %13 = vector.broadcast %cst_13 : f32 to vector<16x128xf32>
    %14 = arith.mulf %12, %13 : vector<16x128xf32>
    %15 = vector.extract_strided_slice %0 {offsets = [0, 0, 0], sizes = [1, 16, 128], strides = [1, 1, 1]} : vector<4x16x128xf32> to vector<1x16x128xf32>
    %16 = vector.shape_cast %15 : vector<1x16x128xf32> to vector<16x128xf32>
    %17 = vector.extract_strided_slice %1 {offsets = [0, 0, 0], sizes = [1, 16, 128], strides = [1, 1, 1]} : vector<4x16x128xf32> to vector<1x16x128xf32>
    %18 = vector.shape_cast %17 : vector<1x16x128xf32> to vector<16x128xf32>
    %19 = arith.subf %14, %18 : vector<16x128xf32>
    %20 = math.absf %19 : vector<16x128xf32>
    %cst_14 = arith.constant 5.000000e+00 : f32
    %21 = vector.broadcast %cst_14 : f32 to vector<16x128xf32>
    %22 = arith.mulf %21, %20 : vector<16x128xf32>
    %cst_15 = arith.constant 1.000000e+00 : f32
    %23 = vector.broadcast %cst_15 : f32 to vector<16x128xf32>
    %24 = arith.addf %23, %22 : vector<16x128xf32>
    %25 = arith.mulf %24, %4 : vector<16x128xf32>
    %26 = math.absf %16 : vector<16x128xf32>
    %cst_16 = arith.constant 0.000000e+00 : f32
    %27 = vector.broadcast %cst_16 : f32 to vector<16x128xf32>
    %28 = arith.subf %27, %26 : vector<16x128xf32>
    %29 = math.exp %28 : vector<16x128xf32>
    %cst_17 = arith.constant 0.000000e+00 : f32
    %30 = vector.broadcast %cst_17 : f32 to vector<16x128xf32>
    %31 = arith.maximumf %16, %30 : vector<16x128xf32>
    %32 = arith.mulf %16, %18 : vector<16x128xf32>
    %33 = arith.subf %31, %32 : vector<16x128xf32>
    %cst_18 = arith.constant 1.000000e+00 : f32
    %34 = vector.broadcast %cst_18 : f32 to vector<16x128xf32>
    %35 = arith.addf %34, %29 : vector<16x128xf32>
    %36 = math.log %35 : vector<16x128xf32>
    %37 = arith.addf %33, %36 : vector<16x128xf32>
    %cst_19 = arith.constant 1.000000e+00 : f32
    %38 = vector.broadcast %cst_19 : f32 to vector<16x128xf32>
    %39 = arith.addf %38, %29 : vector<16x128xf32>
    %cst_20 = arith.constant 0.000000e+00 : f32
    %40 = vector.broadcast %cst_20 : f32 to vector<16x128xf32>
    %41 = arith.cmpf oge, %16, %40 : vector<16x128xf32>
    %cst_21 = arith.constant 1.000000e+00 : f32
    %42 = vector.broadcast %cst_21 : f32 to vector<16x128xf32>
    %43 = arith.select %41, %42, %29 : vector<16x128xi1>, vector<16x128xf32>
    %44 = arith.mulf %43, %18 : vector<16x128xf32>
    %45 = arith.addf %44, %39 : vector<16x128xf32>
    %cst_22 = arith.constant 1.000000e+00 : f32
    %46 = vector.broadcast %cst_22 : f32 to vector<16x128xf32>
    %47 = arith.subf %46, %18 : vector<16x128xf32>
    %48 = arith.mulf %43, %47 : vector<16x128xf32>
    %cst_23 = arith.constant 1.000000e+00 : f32
    %49 = vector.broadcast %cst_23 : f32 to vector<16x128xf32>
    %50 = arith.addf %49, %18 : vector<16x128xf32>
    %51 = arith.mulf %50, %39 : vector<16x128xf32>
    %52 = arith.addf %48, %51 : vector<16x128xf32>
    %53 = tpu.reciprocal %52 {approx = true} : vector<16x128xf32> -> vector<16x128xf32>
    %54 = arith.mulf %52, %53 : vector<16x128xf32>
    %cst_24 = arith.constant 2.000000e+00 : f32
    %55 = vector.broadcast %cst_24 : f32 to vector<16x128xf32>
    %56 = arith.subf %55, %54 : vector<16x128xf32>
    %57 = arith.mulf %53, %56 : vector<16x128xf32>
    %58 = arith.mulf %45, %57 : vector<16x128xf32>
    %cst_25 = arith.constant 1.000000e+00 : f32
    %59 = vector.broadcast %cst_25 : f32 to vector<16x128xf32>
    %60 = arith.subf %59, %58 : vector<16x128xf32>
    %61 = arith.addf %37, %60 : vector<16x128xf32>
    %62 = arith.mulf %25, %61 : vector<16x128xf32>
    %cst_26 = arith.constant dense<0.000000e+00> : vector<16xf32>
    %63 = vector.multi_reduction <add>, %62, %cst_26 [1] : vector<16x128xf32> to vector<16xf32>
    %64 = vector.shape_cast %63 : vector<16xf32> to vector<16x1xf32>
    %cst_27 = arith.constant dense<0.000000e+00> : vector<1xf32>
    %65 = vector.multi_reduction <add>, %64, %cst_27 [0] : vector<16x1xf32> to vector<1xf32>
    %66 = vector.shape_cast %65 : vector<1xf32> to vector<1x1xf32>
    %cst_28 = arith.constant dense<0.000000e+00> : vector<16xf32>
    %67 = vector.multi_reduction <add>, %25, %cst_28 [1] : vector<16x128xf32> to vector<16xf32>
    %68 = vector.shape_cast %67 : vector<16xf32> to vector<16x1xf32>
    %cst_29 = arith.constant dense<0.000000e+00> : vector<1xf32>
    %69 = vector.multi_reduction <add>, %68, %cst_29 [0] : vector<16x1xf32> to vector<1xf32>
    %70 = vector.shape_cast %69 : vector<1xf32> to vector<1x1xf32>
    %c0_i32 = arith.constant 0 : i32
    %71 = vector.broadcast %c0_i32 : i32 to vector<1x4xi32>
    %72 = arith.cmpi eq, %8, %71 : vector<1x4xi32>
    %73 = arith.divf %66, %70 : vector<1x1xf32>
    %74 = vector.shape_cast %73 : vector<1x1xf32> to vector<1x1xf32>
    %75 = vector.broadcast %74 : vector<1x1xf32> to vector<1x4xf32>
    %76 = arith.select %72, %75, %9 : vector<1x4xi1>, vector<1x4xf32>
    %77 = vector.extract_strided_slice %7 {offsets = [1, 0, 0], sizes = [1, 16, 128], strides = [1, 1, 1]} : vector<4x16x128xf32> to vector<1x16x128xf32>
    %78 = vector.shape_cast %77 : vector<1x16x128xf32> to vector<16x128xf32>
    %cst_30 = arith.constant dense<0.000000e+00> : vector<16x128xf32>
    %79 = tpu.matmul %2, %78, %cst_30 {dimension_numbers = #tpu.dot_dimension_numbers<[1], [0], [0], [1], [0, 0, 1, 1], [], []>} : vector<16x16xf32>, vector<16x128xf32>, vector<16x128xf32> -> vector<16x128xf32>
    %cst_31 = arith.constant 0.00104058278 : f32
    %80 = vector.broadcast %cst_31 : f32 to vector<16x128xf32>
    %81 = arith.mulf %79, %80 : vector<16x128xf32>
    %82 = vector.extract_strided_slice %0 {offsets = [1, 0, 0], sizes = [1, 16, 128], strides = [1, 1, 1]} : vector<4x16x128xf32> to vector<1x16x128xf32>
    %83 = vector.shape_cast %82 : vector<1x16x128xf32> to vector<16x128xf32>
    %84 = vector.extract_strided_slice %1 {offsets = [1, 0, 0], sizes = [1, 16, 128], strides = [1, 1, 1]} : vector<4x16x128xf32> to vector<1x16x128xf32>
    %85 = vector.shape_cast %84 : vector<1x16x128xf32> to vector<16x128xf32>
    %86 = arith.subf %81, %85 : vector<16x128xf32>
    %87 = math.absf %86 : vector<16x128xf32>
    %cst_32 = arith.constant 5.000000e+00 : f32
    %88 = vector.broadcast %cst_32 : f32 to vector<16x128xf32>
    %89 = arith.mulf %88, %87 : vector<16x128xf32>
    %cst_33 = arith.constant 1.000000e+00 : f32
    %90 = vector.broadcast %cst_33 : f32 to vector<16x128xf32>
    %91 = arith.addf %90, %89 : vector<16x128xf32>
    %92 = arith.mulf %91, %4 : vector<16x128xf32>
    %93 = math.absf %83 : vector<16x128xf32>
    %cst_34 = arith.constant 0.000000e+00 : f32
    %94 = vector.broadcast %cst_34 : f32 to vector<16x128xf32>
    %95 = arith.subf %94, %93 : vector<16x128xf32>
    %96 = math.exp %95 : vector<16x128xf32>
    %cst_35 = arith.constant 0.000000e+00 : f32
    %97 = vector.broadcast %cst_35 : f32 to vector<16x128xf32>
    %98 = arith.maximumf %83, %97 : vector<16x128xf32>
    %99 = arith.mulf %83, %85 : vector<16x128xf32>
    %100 = arith.subf %98, %99 : vector<16x128xf32>
    %cst_36 = arith.constant 1.000000e+00 : f32
    %101 = vector.broadcast %cst_36 : f32 to vector<16x128xf32>
    %102 = arith.addf %101, %96 : vector<16x128xf32>
    %103 = math.log %102 : vector<16x128xf32>
    %104 = arith.addf %100, %103 : vector<16x128xf32>
    %cst_37 = arith.constant 1.000000e+00 : f32
    %105 = vector.broadcast %cst_37 : f32 to vector<16x128xf32>
    %106 = arith.addf %105, %96 : vector<16x128xf32>
    %cst_38 = arith.constant 0.000000e+00 : f32
    %107 = vector.broadcast %cst_38 : f32 to vector<16x128xf32>
    %108 = arith.cmpf oge, %83, %107 : vector<16x128xf32>
    %cst_39 = arith.constant 1.000000e+00 : f32
    %109 = vector.broadcast %cst_39 : f32 to vector<16x128xf32>
    %110 = arith.select %108, %109, %96 : vector<16x128xi1>, vector<16x128xf32>
    %111 = arith.mulf %110, %85 : vector<16x128xf32>
    %112 = arith.addf %111, %106 : vector<16x128xf32>
    %cst_40 = arith.constant 1.000000e+00 : f32
    %113 = vector.broadcast %cst_40 : f32 to vector<16x128xf32>
    %114 = arith.subf %113, %85 : vector<16x128xf32>
    %115 = arith.mulf %110, %114 : vector<16x128xf32>
    %cst_41 = arith.constant 1.000000e+00 : f32
    %116 = vector.broadcast %cst_41 : f32 to vector<16x128xf32>
    %117 = arith.addf %116, %85 : vector<16x128xf32>
    %118 = arith.mulf %117, %106 : vector<16x128xf32>
    %119 = arith.addf %115, %118 : vector<16x128xf32>
    %120 = tpu.reciprocal %119 {approx = true} : vector<16x128xf32> -> vector<16x128xf32>
    %121 = arith.mulf %119, %120 : vector<16x128xf32>
    %cst_42 = arith.constant 2.000000e+00 : f32
    %122 = vector.broadcast %cst_42 : f32 to vector<16x128xf32>
    %123 = arith.subf %122, %121 : vector<16x128xf32>
    %124 = arith.mulf %120, %123 : vector<16x128xf32>
    %125 = arith.mulf %112, %124 : vector<16x128xf32>
    %cst_43 = arith.constant 1.000000e+00 : f32
    %126 = vector.broadcast %cst_43 : f32 to vector<16x128xf32>
    %127 = arith.subf %126, %125 : vector<16x128xf32>
    %128 = arith.addf %104, %127 : vector<16x128xf32>
    %129 = arith.mulf %92, %128 : vector<16x128xf32>
    %cst_44 = arith.constant dense<0.000000e+00> : vector<16xf32>
    %130 = vector.multi_reduction <add>, %129, %cst_44 [1] : vector<16x128xf32> to vector<16xf32>
    %131 = vector.shape_cast %130 : vector<16xf32> to vector<16x1xf32>
    %cst_45 = arith.constant dense<0.000000e+00> : vector<1xf32>
    %132 = vector.multi_reduction <add>, %131, %cst_45 [0] : vector<16x1xf32> to vector<1xf32>
    %133 = vector.shape_cast %132 : vector<1xf32> to vector<1x1xf32>
    %cst_46 = arith.constant dense<0.000000e+00> : vector<16xf32>
    %134 = vector.multi_reduction <add>, %92, %cst_46 [1] : vector<16x128xf32> to vector<16xf32>
    %135 = vector.shape_cast %134 : vector<16xf32> to vector<16x1xf32>
    %cst_47 = arith.constant dense<0.000000e+00> : vector<1xf32>
    %136 = vector.multi_reduction <add>, %135, %cst_47 [0] : vector<16x1xf32> to vector<1xf32>
    %137 = vector.shape_cast %136 : vector<1xf32> to vector<1x1xf32>
    %c1_i32 = arith.constant 1 : i32
    %138 = vector.broadcast %c1_i32 : i32 to vector<1x4xi32>
    %139 = arith.cmpi eq, %8, %138 : vector<1x4xi32>
    %140 = arith.divf %133, %137 : vector<1x1xf32>
    %141 = vector.shape_cast %140 : vector<1x1xf32> to vector<1x1xf32>
    %142 = vector.broadcast %141 : vector<1x1xf32> to vector<1x4xf32>
    %143 = arith.select %139, %142, %76 : vector<1x4xi1>, vector<1x4xf32>
    %144 = vector.extract_strided_slice %7 {offsets = [2, 0, 0], sizes = [1, 16, 128], strides = [1, 1, 1]} : vector<4x16x128xf32> to vector<1x16x128xf32>
    %145 = vector.shape_cast %144 : vector<1x16x128xf32> to vector<16x128xf32>
    %cst_48 = arith.constant dense<0.000000e+00> : vector<16x128xf32>
    %146 = tpu.matmul %2, %145, %cst_48 {dimension_numbers = #tpu.dot_dimension_numbers<[1], [0], [0], [1], [0, 0, 1, 1], [], []>} : vector<16x16xf32>, vector<16x128xf32>, vector<16x128xf32> -> vector<16x128xf32>
    %cst_49 = arith.constant 0.00104058278 : f32
    %147 = vector.broadcast %cst_49 : f32 to vector<16x128xf32>
    %148 = arith.mulf %146, %147 : vector<16x128xf32>
    %149 = vector.extract_strided_slice %0 {offsets = [2, 0, 0], sizes = [1, 16, 128], strides = [1, 1, 1]} : vector<4x16x128xf32> to vector<1x16x128xf32>
    %150 = vector.shape_cast %149 : vector<1x16x128xf32> to vector<16x128xf32>
    %151 = vector.extract_strided_slice %1 {offsets = [2, 0, 0], sizes = [1, 16, 128], strides = [1, 1, 1]} : vector<4x16x128xf32> to vector<1x16x128xf32>
    %152 = vector.shape_cast %151 : vector<1x16x128xf32> to vector<16x128xf32>
    %153 = arith.subf %148, %152 : vector<16x128xf32>
    %154 = math.absf %153 : vector<16x128xf32>
    %cst_50 = arith.constant 5.000000e+00 : f32
    %155 = vector.broadcast %cst_50 : f32 to vector<16x128xf32>
    %156 = arith.mulf %155, %154 : vector<16x128xf32>
    %cst_51 = arith.constant 1.000000e+00 : f32
    %157 = vector.broadcast %cst_51 : f32 to vector<16x128xf32>
    %158 = arith.addf %157, %156 : vector<16x128xf32>
    %159 = arith.mulf %158, %4 : vector<16x128xf32>
    %160 = math.absf %150 : vector<16x128xf32>
    %cst_52 = arith.constant 0.000000e+00 : f32
    %161 = vector.broadcast %cst_52 : f32 to vector<16x128xf32>
    %162 = arith.subf %161, %160 : vector<16x128xf32>
    %163 = math.exp %162 : vector<16x128xf32>
    %cst_53 = arith.constant 0.000000e+00 : f32
    %164 = vector.broadcast %cst_53 : f32 to vector<16x128xf32>
    %165 = arith.maximumf %150, %164 : vector<16x128xf32>
    %166 = arith.mulf %150, %152 : vector<16x128xf32>
    %167 = arith.subf %165, %166 : vector<16x128xf32>
    %cst_54 = arith.constant 1.000000e+00 : f32
    %168 = vector.broadcast %cst_54 : f32 to vector<16x128xf32>
    %169 = arith.addf %168, %163 : vector<16x128xf32>
    %170 = math.log %169 : vector<16x128xf32>
    %171 = arith.addf %167, %170 : vector<16x128xf32>
    %cst_55 = arith.constant 1.000000e+00 : f32
    %172 = vector.broadcast %cst_55 : f32 to vector<16x128xf32>
    %173 = arith.addf %172, %163 : vector<16x128xf32>
    %cst_56 = arith.constant 0.000000e+00 : f32
    %174 = vector.broadcast %cst_56 : f32 to vector<16x128xf32>
    %175 = arith.cmpf oge, %150, %174 : vector<16x128xf32>
    %cst_57 = arith.constant 1.000000e+00 : f32
    %176 = vector.broadcast %cst_57 : f32 to vector<16x128xf32>
    %177 = arith.select %175, %176, %163 : vector<16x128xi1>, vector<16x128xf32>
    %178 = arith.mulf %177, %152 : vector<16x128xf32>
    %179 = arith.addf %178, %173 : vector<16x128xf32>
    %cst_58 = arith.constant 1.000000e+00 : f32
    %180 = vector.broadcast %cst_58 : f32 to vector<16x128xf32>
    %181 = arith.subf %180, %152 : vector<16x128xf32>
    %182 = arith.mulf %177, %181 : vector<16x128xf32>
    %cst_59 = arith.constant 1.000000e+00 : f32
    %183 = vector.broadcast %cst_59 : f32 to vector<16x128xf32>
    %184 = arith.addf %183, %152 : vector<16x128xf32>
    %185 = arith.mulf %184, %173 : vector<16x128xf32>
    %186 = arith.addf %182, %185 : vector<16x128xf32>
    %187 = tpu.reciprocal %186 {approx = true} : vector<16x128xf32> -> vector<16x128xf32>
    %188 = arith.mulf %186, %187 : vector<16x128xf32>
    %cst_60 = arith.constant 2.000000e+00 : f32
    %189 = vector.broadcast %cst_60 : f32 to vector<16x128xf32>
    %190 = arith.subf %189, %188 : vector<16x128xf32>
    %191 = arith.mulf %187, %190 : vector<16x128xf32>
    %192 = arith.mulf %179, %191 : vector<16x128xf32>
    %cst_61 = arith.constant 1.000000e+00 : f32
    %193 = vector.broadcast %cst_61 : f32 to vector<16x128xf32>
    %194 = arith.subf %193, %192 : vector<16x128xf32>
    %195 = arith.addf %171, %194 : vector<16x128xf32>
    %196 = arith.mulf %159, %195 : vector<16x128xf32>
    %cst_62 = arith.constant dense<0.000000e+00> : vector<16xf32>
    %197 = vector.multi_reduction <add>, %196, %cst_62 [1] : vector<16x128xf32> to vector<16xf32>
    %198 = vector.shape_cast %197 : vector<16xf32> to vector<16x1xf32>
    %cst_63 = arith.constant dense<0.000000e+00> : vector<1xf32>
    %199 = vector.multi_reduction <add>, %198, %cst_63 [0] : vector<16x1xf32> to vector<1xf32>
    %200 = vector.shape_cast %199 : vector<1xf32> to vector<1x1xf32>
    %cst_64 = arith.constant dense<0.000000e+00> : vector<16xf32>
    %201 = vector.multi_reduction <add>, %159, %cst_64 [1] : vector<16x128xf32> to vector<16xf32>
    %202 = vector.shape_cast %201 : vector<16xf32> to vector<16x1xf32>
    %cst_65 = arith.constant dense<0.000000e+00> : vector<1xf32>
    %203 = vector.multi_reduction <add>, %202, %cst_65 [0] : vector<16x1xf32> to vector<1xf32>
    %204 = vector.shape_cast %203 : vector<1xf32> to vector<1x1xf32>
    %c2_i32 = arith.constant 2 : i32
    %205 = vector.broadcast %c2_i32 : i32 to vector<1x4xi32>
    %206 = arith.cmpi eq, %8, %205 : vector<1x4xi32>
    %207 = arith.divf %200, %204 : vector<1x1xf32>
    %208 = vector.shape_cast %207 : vector<1x1xf32> to vector<1x1xf32>
    %209 = vector.broadcast %208 : vector<1x1xf32> to vector<1x4xf32>
    %210 = arith.select %206, %209, %143 : vector<1x4xi1>, vector<1x4xf32>
    %211 = vector.extract_strided_slice %7 {offsets = [3, 0, 0], sizes = [1, 16, 128], strides = [1, 1, 1]} : vector<4x16x128xf32> to vector<1x16x128xf32>
    %212 = vector.shape_cast %211 : vector<1x16x128xf32> to vector<16x128xf32>
    %cst_66 = arith.constant dense<0.000000e+00> : vector<16x128xf32>
    %213 = tpu.matmul %2, %212, %cst_66 {dimension_numbers = #tpu.dot_dimension_numbers<[1], [0], [0], [1], [0, 0, 1, 1], [], []>} : vector<16x16xf32>, vector<16x128xf32>, vector<16x128xf32> -> vector<16x128xf32>
    %cst_67 = arith.constant 0.00104058278 : f32
    %214 = vector.broadcast %cst_67 : f32 to vector<16x128xf32>
    %215 = arith.mulf %213, %214 : vector<16x128xf32>
    %216 = vector.extract_strided_slice %0 {offsets = [3, 0, 0], sizes = [1, 16, 128], strides = [1, 1, 1]} : vector<4x16x128xf32> to vector<1x16x128xf32>
    %217 = vector.shape_cast %216 : vector<1x16x128xf32> to vector<16x128xf32>
    %218 = vector.extract_strided_slice %1 {offsets = [3, 0, 0], sizes = [1, 16, 128], strides = [1, 1, 1]} : vector<4x16x128xf32> to vector<1x16x128xf32>
    %219 = vector.shape_cast %218 : vector<1x16x128xf32> to vector<16x128xf32>
    %220 = arith.subf %215, %219 : vector<16x128xf32>
    %221 = math.absf %220 : vector<16x128xf32>
    %cst_68 = arith.constant 5.000000e+00 : f32
    %222 = vector.broadcast %cst_68 : f32 to vector<16x128xf32>
    %223 = arith.mulf %222, %221 : vector<16x128xf32>
    %cst_69 = arith.constant 1.000000e+00 : f32
    %224 = vector.broadcast %cst_69 : f32 to vector<16x128xf32>
    %225 = arith.addf %224, %223 : vector<16x128xf32>
    %226 = arith.mulf %225, %4 : vector<16x128xf32>
    %227 = math.absf %217 : vector<16x128xf32>
    %cst_70 = arith.constant 0.000000e+00 : f32
    %228 = vector.broadcast %cst_70 : f32 to vector<16x128xf32>
    %229 = arith.subf %228, %227 : vector<16x128xf32>
    %230 = math.exp %229 : vector<16x128xf32>
    %cst_71 = arith.constant 0.000000e+00 : f32
    %231 = vector.broadcast %cst_71 : f32 to vector<16x128xf32>
    %232 = arith.maximumf %217, %231 : vector<16x128xf32>
    %233 = arith.mulf %217, %219 : vector<16x128xf32>
    %234 = arith.subf %232, %233 : vector<16x128xf32>
    %cst_72 = arith.constant 1.000000e+00 : f32
    %235 = vector.broadcast %cst_72 : f32 to vector<16x128xf32>
    %236 = arith.addf %235, %230 : vector<16x128xf32>
    %237 = math.log %236 : vector<16x128xf32>
    %238 = arith.addf %234, %237 : vector<16x128xf32>
    %cst_73 = arith.constant 1.000000e+00 : f32
    %239 = vector.broadcast %cst_73 : f32 to vector<16x128xf32>
    %240 = arith.addf %239, %230 : vector<16x128xf32>
    %cst_74 = arith.constant 0.000000e+00 : f32
    %241 = vector.broadcast %cst_74 : f32 to vector<16x128xf32>
    %242 = arith.cmpf oge, %217, %241 : vector<16x128xf32>
    %cst_75 = arith.constant 1.000000e+00 : f32
    %243 = vector.broadcast %cst_75 : f32 to vector<16x128xf32>
    %244 = arith.select %242, %243, %230 : vector<16x128xi1>, vector<16x128xf32>
    %245 = arith.mulf %244, %219 : vector<16x128xf32>
    %246 = arith.addf %245, %240 : vector<16x128xf32>
    %cst_76 = arith.constant 1.000000e+00 : f32
    %247 = vector.broadcast %cst_76 : f32 to vector<16x128xf32>
    %248 = arith.subf %247, %219 : vector<16x128xf32>
    %249 = arith.mulf %244, %248 : vector<16x128xf32>
    %cst_77 = arith.constant 1.000000e+00 : f32
    %250 = vector.broadcast %cst_77 : f32 to vector<16x128xf32>
    %251 = arith.addf %250, %219 : vector<16x128xf32>
    %252 = arith.mulf %251, %240 : vector<16x128xf32>
    %253 = arith.addf %249, %252 : vector<16x128xf32>
    %254 = tpu.reciprocal %253 {approx = true} : vector<16x128xf32> -> vector<16x128xf32>
    %255 = arith.mulf %253, %254 : vector<16x128xf32>
    %cst_78 = arith.constant 2.000000e+00 : f32
    %256 = vector.broadcast %cst_78 : f32 to vector<16x128xf32>
    %257 = arith.subf %256, %255 : vector<16x128xf32>
    %258 = arith.mulf %254, %257 : vector<16x128xf32>
    %259 = arith.mulf %246, %258 : vector<16x128xf32>
    %cst_79 = arith.constant 1.000000e+00 : f32
    %260 = vector.broadcast %cst_79 : f32 to vector<16x128xf32>
    %261 = arith.subf %260, %259 : vector<16x128xf32>
    %262 = arith.addf %238, %261 : vector<16x128xf32>
    %263 = arith.mulf %226, %262 : vector<16x128xf32>
    %cst_80 = arith.constant dense<0.000000e+00> : vector<16xf32>
    %264 = vector.multi_reduction <add>, %263, %cst_80 [1] : vector<16x128xf32> to vector<16xf32>
    %265 = vector.shape_cast %264 : vector<16xf32> to vector<16x1xf32>
    %cst_81 = arith.constant dense<0.000000e+00> : vector<1xf32>
    %266 = vector.multi_reduction <add>, %265, %cst_81 [0] : vector<16x1xf32> to vector<1xf32>
    %267 = vector.shape_cast %266 : vector<1xf32> to vector<1x1xf32>
    %cst_82 = arith.constant dense<0.000000e+00> : vector<16xf32>
    %268 = vector.multi_reduction <add>, %226, %cst_82 [1] : vector<16x128xf32> to vector<16xf32>
    %269 = vector.shape_cast %268 : vector<16xf32> to vector<16x1xf32>
    %cst_83 = arith.constant dense<0.000000e+00> : vector<1xf32>
    %270 = vector.multi_reduction <add>, %269, %cst_83 [0] : vector<16x1xf32> to vector<1xf32>
    %271 = vector.shape_cast %270 : vector<1xf32> to vector<1x1xf32>
    %c3_i32 = arith.constant 3 : i32
    %272 = vector.broadcast %c3_i32 : i32 to vector<1x4xi32>
    %273 = arith.cmpi eq, %8, %272 : vector<1x4xi32>
    %274 = arith.divf %267, %271 : vector<1x1xf32>
    %275 = vector.shape_cast %274 : vector<1x1xf32> to vector<1x1xf32>
    %276 = vector.broadcast %275 : vector<1x1xf32> to vector<1x4xf32>
    %277 = arith.select %273, %276, %210 : vector<1x4xi1>, vector<1x4xf32>
    %278 = vector.shape_cast %277 : vector<1x4xf32> to vector<1x1x4xf32>
    %c0_84 = arith.constant 0 : index
    %c0_85 = arith.constant 0 : index
    %c0_86 = arith.constant 0 : index
    %279 = vector.load %arg6[%c0_84, %c0_85, %c0_86] : memref<1x1x4xf32, #tpu.memory_space<vmem>>, vector<1x1x4xf32>
    tpu.vector_store %arg6[%c0_84, %c0_85, %c0_86], %278 {strides = array<i32>} : memref<1x1x4xf32, #tpu.memory_space<vmem>>, vector<1x1x4xf32>,
    return
  }
  func.func @transform_0(%arg0: i32) -> (i32, i32, i32) {
    %c0_i32 = arith.constant 0 : i32
    %c0_i32_0 = arith.constant 0 : i32
    %c0_i32_1 = arith.constant 0 : i32
    return %arg0, %c0_i32, %c0_i32_0 : i32, i32, i32
  }
  func.func @transform_1(%arg0: i32) -> (i32, i32, i32) {
    %c0_i32 = arith.constant 0 : i32
    %c0_i32_0 = arith.constant 0 : i32
    %c0_i32_1 = arith.constant 0 : i32
    return %arg0, %c0_i32, %c0_i32_0 : i32, i32, i32
  }
  func.func @transform_2(%arg0: i32) -> (i32, i32) {
    %c0_i32 = arith.constant 0 : i32
    %c0_i32_0 = arith.constant 0 : i32
    %c0_i32_1 = arith.constant 0 : i32
    return %c0_i32, %c0_i32_0 : i32, i32
  }
  func.func @transform_3(%arg0: i32) -> (i32, i32) {
    %c0_i32 = arith.constant 0 : i32
    %c0_i32_0 = arith.constant 0 : i32
    %c0_i32_1 = arith.constant 0 : i32
    return %c0_i32, %c0_i32_0 : i32, i32
  }
  func.func @transform_4(%arg0: i32) -> (i32, i32) {
    %c0_i32 = arith.constant 0 : i32
    %c0_i32_0 = arith.constant 0 : i32
    %c0_i32_1 = arith.constant 0 : i32
    return %c0_i32, %c0_i32_0 : i32, i32
  }
  func.func @transform_5(%arg0: i32) -> (i32, i32, i32) {
    %c0_i32 = arith.constant 0 : i32
    %c0_i32_0 = arith.constant 0 : i32
    %c0_i32_1 = arith.constant 0 : i32
    return %arg0, %c0_i32, %c0_i32_0 : i32, i32, i32
  }
}

</mosaic_0001>

<llo_original>
// kernel: tpu_custom_call.1
$region0: #{tpu_custom_call.1}
  #allocation0 [shape = 'u32[]', space=smem, size = 0x4, offset = 0x4, fixed_abs, tag = 'smem constant byte address 0x4 - core index']
  #allocation1 [shape = 'u32[144,128]{1,0:T(1,128)}', space=vmem, size = 0x12000, scoped, tag = 'internal scratch']
  %s0 = inlined_call_operand.hbm [shape: f32[8,16,128], index: 0, kind: input, shape index: {}]
  %s1 = inlined_call_operand.hbm [shape: f32[8,16,128], index: 1, kind: input, shape index: {}]
  %s2 = inlined_call_operand.hbm [shape: f32[16,16], index: 2, kind: input, shape index: {}]
  %s3 = inlined_call_operand.hbm [shape: f32[128,128], index: 3, kind: input, shape index: {}]
  %s4 = inlined_call_operand.hbm [shape: f32[16,128], index: 4, kind: input, shape index: {}]
  %s5 = inlined_call_operand.hbm [shape: f32[2,1,4], index: 5, kind: output, shape index: {}]
  %s6 = sld [smem:[#allocation0]]
  $region73: #{tpu_custom_call.1} parent=0
    _
  %s8 = ssub.s32 1, %s6
  %s9 = scalar_select 0, %s8, %s6
  $region1: #{tpu_custom_call.1} parent=0
    #allocation2 [shape = 'u8[65536]{0}', space=vmem, size = 0x10000, scoped, tag = 'input window, operand 0']
    #allocation3 [shape = 's32[2]{0}', space=sflag, size = 0x8, scoped, tag = 'scoped memory for tpu_custom_call.1']
    #allocation4 [shape = 's32[2]{0}', space=sflag, size = 0x8, scoped, tag = 'scoped memory for tpu_custom_call.1']
    #allocation5 [shape = 'u8[65536]{0}', space=vmem, size = 0x10000, scoped, tag = 'input window, operand 1']
    #allocation6 [shape = 's32[2]{0}', space=sflag, size = 0x8, scoped, tag = 'scoped memory for tpu_custom_call.1']
    #allocation7 [shape = 'u8[8192]{0}', space=vmem, size = 0x2000, scoped, tag = 'input window, operand 2, single buffered']
    #allocation8 [shape = 'u8[65536]{0}', space=vmem, size = 0x10000, scoped, tag = 'input window, operand 3, single buffered']
    #allocation9 [shape = 's32[1]{0}', space=sflag, size = 0x4, scoped, tag = 'scoped memory for tpu_custom_call.1']
    #allocation10 [shape = 'u8[8192]{0}', space=vmem, size = 0x2000, scoped, tag = 'input window, operand 4, single buffered']
    #allocation11 [shape = 'u8[1024]{0}', space=vmem, size = 0x400, scoped, tag = 'output window, operand 0']
    %10 = vsyncpa [#allocation3], 0
    %s11 = scalar_lea.sflag [#allocation3], 1
    %12 = vsyncpa %s11, 0
    %13 = vsyncpa [#allocation6], 0
    %s14 = scalar_lea.sflag [#allocation6], 1
    %15 = vsyncpa %s14, 0
    %16 = vsyncpa [#allocation9], 0
    %17 = vsyncpa [#allocation4], 0
    %s18 = scalar_lea.sflag [#allocation4], 1
    %19 = vsyncpa %s18, 0
    loop: start=0, step=1, limit=4
    $region2: #{tpu_custom_call.1} parent=1 // loop_pre_header
      _
    $region3: #{tpu_custom_call.1} parent=1 // loop_header
      %s21 = sphi 0, %s25
      %p22 = scmp.ge.s32.totalorder %s21, 4
      %s31 = sphi 0, %s33
      %s34 = sphi 0, %s31
      %s35 = sphi 0, %s34
      %s51 = sphi 0, %s35
      %s57 = sphi 0, %s59
      %s60 = sphi 0, %s57
      %s61 = sphi 0, %s60
      %s77 = sphi 0, %s61
      %s81 = sphi 0, %s81
      %s83 = sphi 0, %s81
      %s84 = sphi 0, %s83
      %s98 = sphi 0, %s84
      %s102 = sphi 0, %s102
      %s104 = sphi 0, %s102
      %s105 = sphi 0, %s104
      %s119 = sphi 0, %s105
      %s123 = sphi 0, %s123
      %s125 = sphi 0, %s123
      %s126 = sphi 0, %s125
      %s140 = sphi 0, %s126
      %s146 = sphi 0, %s148
      %s149 = sphi 0, %s146
      %s150 = sphi 0, %s149
      %s166 = sphi 0, %s150
    $region4: #{tpu_custom_call.1} parent=1 // loop_header_branch
      %24 = sbr.rel (%p22) target = $region8
    $region5: #{tpu_custom_call.1} parent=1 // loop_body
      %s26 = ssub.s32 %s21, 1
      %s27 = ssub.s32 %s21, 2
      %s28 = sadd.s32 %s21, 1
      %s29 = ssub.s32 %s21, %s28
      %p30 = scmp.eq.s32.totalorder %s29, 0
      %s32 = sadd.s32 %s31, 1
      %s33 = scalar_select %p30, %s31, %s32
      %p36 = pneg %p30
      %p37 = scmp.eq.s32.totalorder %s21, 1
      %p38 = por %p36, %p37
      %p39 = scmp.ne.s32.totalorder %s31, %s34
      %p40 = scmp.eq.s32.totalorder %s21, 0
      %p41 = por %p39, %p40
      %p42 = scmp.ne.s32.totalorder %s31, %s34
      %p43 = scmp.eq.s32.totalorder %s26, 1
      %p44 = por %p42, %p43
      %p45 = scmp.ne.s32.totalorder %s34, %s35
      %p46 = scmp.eq.s32.totalorder %s26, 0
      %p47 = por %p45, %p46
      %p48 = scmp.ne.s32.totalorder %s34, %s35
      %p49 = scmp.eq.s32.totalorder %s27, 1
      %p50 = por %p48, %p49
      %p52 = scmp.ne.s32.totalorder %s35, %s51
      %p53 = scmp.eq.s32.totalorder %s27, 0
      %p54 = por %p52, %p53
      %s55 = ssub.s32 %s21, %s28
      %p56 = scmp.eq.s32.totalorder %s55, 0
      %s58 = sadd.s32 %s57, 1
      %s59 = scalar_select %p56, %s57, %s58
      %p62 = pneg %p56
      %p63 = scmp.eq.s32.totalorder %s21, 1
      %p64 = por %p62, %p63
      %p65 = scmp.ne.s32.totalorder %s57, %s60
      %p66 = scmp.eq.s32.totalorder %s21, 0
      %p67 = por %p65, %p66
      %p68 = scmp.ne.s32.totalorder %s57, %s60
      %p69 = scmp.eq.s32.totalorder %s26, 1
      %p70 = por %p68, %p69
      %p71 = scmp.ne.s32.totalorder %s60, %s61
      %p72 = scmp.eq.s32.totalorder %s26, 0
      %p73 = por %p71, %p72
      %p74 = scmp.ne.s32.totalorder %s60, %s61
      %p75 = scmp.eq.s32.totalorder %s27, 1
      %p76 = por %p74, %p75
      %p78 = scmp.ne.s32.totalorder %s61, %s77
      %p79 = scmp.eq.s32.totalorder %s27, 0
      %p80 = por %p78, %p79
      %s82 = sadd.s32 %s81, 1
      %p85 = scmp.eq.s32.totalorder %s21, 1
      %p86 = scmp.ne.s32.totalorder %s81, %s83
      %p87 = scmp.eq.s32.totalorder %s21, 0
      %p88 = por %p86, %p87
      %p89 = scmp.ne.s32.totalorder %s81, %s83
      %p90 = scmp.eq.s32.totalorder %s26, 1
      %p91 = por %p89, %p90
      %p92 = scmp.ne.s32.totalorder %s83, %s84
      %p93 = scmp.eq.s32.totalorder %s26, 0
      %p94 = por %p92, %p93
      %p95 = scmp.ne.s32.totalorder %s83, %s84
      %p96 = scmp.eq.s32.totalorder %s27, 1
      %p97 = por %p95, %p96
      %p99 = scmp.ne.s32.totalorder %s84, %s98
      %p100 = scmp.eq.s32.totalorder %s27, 0
      %p101 = por %p99, %p100
      %s103 = sadd.s32 %s102, 1
      %p106 = scmp.eq.s32.totalorder %s21, 1
      %p107 = scmp.ne.s32.totalorder %s102, %s104
      %p108 = scmp.eq.s32.totalorder %s21, 0
      %p109 = por %p107, %p108
      %p110 = scmp.ne.s32.totalorder %s102, %s104
      %p111 = scmp.eq.s32.totalorder %s26, 1
      %p112 = por %p110, %p111
      %p113 = scmp.ne.s32.totalorder %s104, %s105
      %p114 = scmp.eq.s32.totalorder %s26, 0
      %p115 = por %p113, %p114
      %p116 = scmp.ne.s32.totalorder %s104, %s105
      %p117 = scmp.eq.s32.totalorder %s27, 1
      %p118 = por %p116, %p117
      %p120 = scmp.ne.s32.totalorder %s105, %s119
      %p121 = scmp.eq.s32.totalorder %s27, 0
      %p122 = por %p120, %p121
      %s124 = sadd.s32 %s123, 1
      %p127 = scmp.eq.s32.totalorder %s21, 1
      %p128 = scmp.ne.s32.totalorder %s123, %s125
      %p129 = scmp.eq.s32.totalorder %s21, 0
      %p130 = por %p128, %p129
      %p131 = scmp.ne.s32.totalorder %s123, %s125
      %p132 = scmp.eq.s32.totalorder %s26, 1
      %p133 = por %p131, %p132
      %p134 = scmp.ne.s32.totalorder %s125, %s126
      %p135 = scmp.eq.s32.totalorder %s26, 0
      %p136 = por %p134, %p135
      %p137 = scmp.ne.s32.totalorder %s125, %s126
      %p138 = scmp.eq.s32.totalorder %s27, 1
      %p139 = por %p137, %p138
      %p141 = scmp.ne.s32.totalorder %s126, %s140
      %p142 = scmp.eq.s32.totalorder %s27, 0
      %p143 = por %p141, %p142
      %s144 = ssub.s32 %s21, %s28
      %p145 = scmp.eq.s32.totalorder %s144, 0
      %s147 = sadd.s32 %s146, 1
      %s148 = scalar_select %p145, %s146, %s147
      %p151 = pneg %p145
      %p152 = scmp.eq.s32.totalorder %s21, 1
      %p153 = por %p151, %p152
      %p154 = scmp.ne.s32.totalorder %s146, %s149
      %p155 = scmp.eq.s32.totalorder %s21, 0
      %p156 = por %p154, %p155
      %p157 = scmp.ne.s32.totalorder %s146, %s149
      %p158 = scmp.eq.s32.totalorder %s26, 1
      %p159 = por %p157, %p158
      %p160 = scmp.ne.s32.totalorder %s149, %s150
      %p161 = scmp.eq.s32.totalorder %s26, 0
      %p162 = por %p160, %p161
      %p163 = scmp.ne.s32.totalorder %s149, %s150
      %p164 = scmp.eq.s32.totalorder %s27, 1
      %p165 = por %p163, %p164
      %p167 = scmp.ne.s32.totalorder %s150, %s166
      %p168 = scmp.eq.s32.totalorder %s27, 0
      %p169 = por %p167, %p168
      %p170 = scmp.le.s32.totalorder 1, %s21
      %p171 = scmp.lt.s32.totalorder %s21, 3
      %p172 = pnand %p170, %p171
      %p173 = pneg %p172
      // Predicated region
      $region9: #{tpu_custom_call.1} parent=5 // pred_check
        _
      $region10: #{tpu_custom_call.1} parent=5 // pred_check_branch
        %175 = sbr.rel (%p172) target = $region12
      $region11: #{tpu_custom_call.1} parent=5 // pred_region
        %s176 = ssub.s32 %s21, 1
        // Predicated region
        $region13: #{tpu_custom_call.1} parent=11 // pred_check
          %p177 = pneg %p94
        $region14: #{tpu_custom_call.1} parent=11 // pred_check_branch
          %179 = sbr.rel (%p177) target = $region16
        $region15: #{tpu_custom_call.1} parent=11 // pred_region
          %s181 = ssub.s32 256, 256
          %182 = vsyncadd [#allocation6], %s181
          %s183 = sshll.u32 [#allocation7], 4
          %s184 = int_to_ptr.vmem [resolvable:$true] %s183
          %189 = dma.hbm_to_vmem [thread:$0]  %s2, 256, %s184, [#allocation6], 128, 128, 8
        $region16: #{tpu_custom_call.1} parent=11 // pred_fallthru
          _
        // Predicated region
        $region17: #{tpu_custom_call.1} parent=11 // pred_check
          %p190 = pneg %p115
        $region18: #{tpu_custom_call.1} parent=11 // pred_check_branch
          %192 = sbr.rel (%p190) target = $region20
        $region19: #{tpu_custom_call.1} parent=11 // pred_region
          %s194 = ssub.s32 2048, 2048
          %195 = vsyncadd [#allocation9], %s194
          %s196 = sshll.u32 [#allocation8], 4
          %s197 = int_to_ptr.vmem [resolvable:$true] %s196
          %202 = dma.hbm_to_vmem [thread:$0]  %s3, 2048, %s197, [#allocation9], 128, 128, 8
        $region20: #{tpu_custom_call.1} parent=11 // pred_fallthru
          _
        // Predicated region
        $region21: #{tpu_custom_call.1} parent=11 // pred_check
          %p203 = pneg %p136
        $region22: #{tpu_custom_call.1} parent=11 // pred_check_branch
          %205 = sbr.rel (%p203) target = $region24
        $region23: #{tpu_custom_call.1} parent=11 // pred_region
          %s207 = ssub.s32 256, 256
          %208 = vsyncadd [#allocation9], %s207
          %s209 = sshll.u32 [#allocation10], 4
          %s210 = int_to_ptr.vmem [resolvable:$true] %s209
          %215 = dma.hbm_to_vmem [thread:$0]  %s4, 256, %s210, [#allocation9], 128, 128, 8
        $region24: #{tpu_custom_call.1} parent=11 // pred_fallthru
          _
      $region12: #{tpu_custom_call.1} parent=5 // pred_fallthru
        _
      %p216 = scmp.lt.s32.totalorder %s21, 2
      // Predicated region
      $region25: #{tpu_custom_call.1} parent=5 // pred_check
        %p217 = pneg %p216
      $region26: #{tpu_custom_call.1} parent=5 // pred_check_branch
        %219 = sbr.rel (%p217) target = $region28
      $region27: #{tpu_custom_call.1} parent=5 // pred_region
        // Predicated region
        $region29: #{tpu_custom_call.1} parent=27 // pred_check
          %p220 = pneg %p41
        $region30: #{tpu_custom_call.1} parent=27 // pred_check_branch
          %222 = sbr.rel (%p220) target = $region32
        $region31: #{tpu_custom_call.1} parent=27 // pred_region
          %s223 = sand.u32 %s31, 1
          %s224 = scalar_lea.sflag [#allocation3], %s223
          %s225 = sand.u32 %s31, 1
          %s226 = smul.addr %s225, 64
          %s227 = scalar_lea.vmem [#allocation2], %s226
          %s228 = smul.u32 4, %s21
          %s230 = ssub.s32 1024, 1024
          %231 = vsyncadd %s224, %s230
          %s232 = smul.addr %s228, 2
          %s233 = smul.addr %s232, 128
          %s234 = scalar_lea.hbm %s0, %s233
          %s235 = sshll.u32 %s227, 4
          %s236 = int_to_ptr.vmem [resolvable:$true] %s235
          %241 = dma.hbm_to_vmem [thread:$0]  %s234, 1024, %s236, %s224, 128, 128, 8
        $region32: #{tpu_custom_call.1} parent=27 // pred_fallthru
          _
        // Predicated region
        $region33: #{tpu_custom_call.1} parent=27 // pred_check
          %p242 = pneg %p67
        $region34: #{tpu_custom_call.1} parent=27 // pred_check_branch
          %244 = sbr.rel (%p242) target = $region36
        $region35: #{tpu_custom_call.1} parent=27 // pred_region
          %s245 = sand.u32 %s21, 1
          %s246 = scalar_lea.sflag [#allocation6], %s245
          %s247 = sand.u32 %s57, 1
          %s248 = smul.addr %s247, 64
          %s249 = scalar_lea.vmem [#allocation5], %s248
          %s250 = smul.u32 4, %s21
          %s252 = ssub.s32 1024, 1024
          %253 = vsyncadd %s246, %s252
          %s254 = smul.addr %s250, 2
          %s255 = smul.addr %s254, 128
          %s256 = scalar_lea.hbm %s1, %s255
          %s257 = sshll.u32 %s249, 4
          %s258 = int_to_ptr.vmem [resolvable:$true] %s257
          %263 = dma.hbm_to_vmem [thread:$0]  %s256, 1024, %s258, %s246, 128, 128, 8
        $region36: #{tpu_custom_call.1} parent=27 // pred_fallthru
          _
      $region28: #{tpu_custom_call.1} parent=5 // pred_fallthru
        _
      %p264 = scmp.le.s32.totalorder 1, %s21
      %p265 = scmp.lt.s32.totalorder %s21, 3
      %p266 = pnand %p264, %p265
      %p267 = pneg %p266
      // Predicated region
      $region37: #{tpu_custom_call.1} parent=5 // pred_check
        _
      $region38: #{tpu_custom_call.1} parent=5 // pred_check_branch
        %269 = sbr.rel (%p266) target = $region40
      $region39: #{tpu_custom_call.1} parent=5 // pred_region
        %s270 = ssub.s32 %s21, 1
        %s271 = sand.u32 %s34, 1
        %s272 = scalar_lea.sflag [#allocation3], %s271
        %s273 = sand.u32 %s34, 1
        %s274 = smul.addr %s273, 64
        %s275 = scalar_lea.vmem [#allocation2], %s274
        // Predicated region
        $region41: #{tpu_custom_call.1} parent=39 // pred_check
          %p276 = pneg %p47
        $region42: #{tpu_custom_call.1} parent=39 // pred_check_branch
          %278 = sbr.rel (%p276) target = $region44
        $region43: #{tpu_custom_call.1} parent=39 // pred_region
          %279 = dma.done %s272, 1024
        $region44: #{tpu_custom_call.1} parent=39 // pred_fallthru
          _
        %s280 = sand.u32 %s26, 1
        %s281 = scalar_lea.sflag [#allocation6], %s280
        %s282 = sand.u32 %s60, 1
        %s283 = smul.addr %s282, 64
        %s284 = scalar_lea.vmem [#allocation5], %s283
        // Predicated region
        $region45: #{tpu_custom_call.1} parent=39 // pred_check
          %p285 = pneg %p73
        $region46: #{tpu_custom_call.1} parent=39 // pred_check_branch
          %287 = sbr.rel (%p285) target = $region48
        $region47: #{tpu_custom_call.1} parent=39 // pred_region
          %288 = dma.done %s281, 1024
        $region48: #{tpu_custom_call.1} parent=39 // pred_fallthru
          _
        // Predicated region
        $region49: #{tpu_custom_call.1} parent=39 // pred_check
          %p289 = pneg %p94
        $region50: #{tpu_custom_call.1} parent=39 // pred_check_branch
          %291 = sbr.rel (%p289) target = $region52
        $region51: #{tpu_custom_call.1} parent=39 // pred_region
          %292 = dma.done [#allocation6], 256
        $region52: #{tpu_custom_call.1} parent=39 // pred_fallthru
          _
        // Predicated region
        $region53: #{tpu_custom_call.1} parent=39 // pred_check
          %p293 = pneg %p115
        $region54: #{tpu_custom_call.1} parent=39 // pred_check_branch
          %295 = sbr.rel (%p293) target = $region56
        $region55: #{tpu_custom_call.1} parent=39 // pred_region
          %296 = dma.done [#allocation9], 2048
        $region56: #{tpu_custom_call.1} parent=39 // pred_fallthru
          _
        // Predicated region
        $region57: #{tpu_custom_call.1} parent=39 // pred_check
          %p297 = pneg %p136
        $region58: #{tpu_custom_call.1} parent=39 // pred_check_branch
          %299 = sbr.rel (%p297) target = $region60
        $region59: #{tpu_custom_call.1} parent=39 // pred_region
          %300 = dma.done [#allocation9], 256
        $region60: #{tpu_custom_call.1} parent=39 // pred_fallthru
          _
        %s301 = sand.u32 %s34, 1
        %s302 = scalar_lea.sflag [#allocation3], %s301
        %s303 = sand.u32 %s34, 1
        %s304 = smul.addr %s303, 64
        %s305 = scalar_lea.vmem [#allocation2], %s304
        %p306 = pneg %p47
        %p307 = pneg %p44
        %s308 = sand.u32 %s26, 1
        %s309 = scalar_lea.sflag [#allocation6], %s308
        %s310 = sand.u32 %s60, 1
        %s311 = smul.addr %s310, 64
        %s312 = scalar_lea.vmem [#allocation5], %s311
        %p313 = pneg %p73
        %p314 = pneg %p70
        %p315 = pneg %p94
        %p316 = pneg %p91
        %p317 = pneg %p115
        %p318 = pneg %p112
        %p319 = pneg %p136
        %p320 = pneg %p133
        %p321 = pneg %p162
        %p322 = pneg %p159
        %s323 = sand.u32 %s149, 1
        %s324 = scalar_lea.sflag [#allocation4], %s323
        %s325 = sand.u32 %s149, 1
        %s326 = scalar_lea.vmem [#allocation11], %s325
        %s327 = smul.u32 4, %s26
        %s328 = smul.u32 4, %s26
        %v329 = vld [vmem:[%s275] sm:$0xff]
        %v330 = vld [vmem:[%s275 + $0x8] sm:$0xff]
        %v331 = vld [vmem:[%s275 + $0x10] sm:$0xff]
        %v332 = vld [vmem:[%s275 + $0x18] sm:$0xff]
        %v333 = vld [vmem:[%s275 + $0x20] sm:$0xff]
        %v334 = vld [vmem:[%s275 + $0x28] sm:$0xff]
        %v335 = vld [vmem:[%s275 + $0x30] sm:$0xff]
        %v336 = vld [vmem:[%s275 + $0x38] sm:$0xff]
        %v337 = vld [vmem:[%s284] sm:$0xff]
        %v338 = vld [vmem:[%s284 + $0x8] sm:$0xff]
        %v339 = vld [vmem:[%s284 + $0x10] sm:$0xff]
        %v340 = vld [vmem:[%s284 + $0x18] sm:$0xff]
        %v341 = vld [vmem:[%s284 + $0x20] sm:$0xff]
        %v342 = vld [vmem:[%s284 + $0x28] sm:$0xff]
        %v343 = vld [vmem:[%s284 + $0x30] sm:$0xff]
        %v344 = vld [vmem:[%s284 + $0x38] sm:$0xff]
        %v345 = vld [vmem:[#allocation7] sm:$0xff]
        %v346 = vld [vmem:[#allocation7 + $0x8] sm:$0xff]
        %v347 = vld [vmem:[#allocation8] sm:$0xff]
        %v348 = vld [vmem:[#allocation8 + $0x8] sm:$0xff]
        %v349 = vld [vmem:[#allocation8 + $0x10] sm:$0xff]
        %v350 = vld [vmem:[#allocation8 + $0x18] sm:$0xff]
        %v351 = vld [vmem:[#allocation8 + $0x20] sm:$0xff]
        %v352 = vld [vmem:[#allocation8 + $0x28] sm:$0xff]
        %v353 = vld [vmem:[#allocation8 + $0x30] sm:$0xff]
        %v354 = vld [vmem:[#allocation8 + $0x38] sm:$0xff]
        %v355 = vld [vmem:[#allocation8 + $0x40] sm:$0xff]
        %v356 = vld [vmem:[#allocation8 + $0x48] sm:$0xff]
        %v357 = vld [vmem:[#allocation8 + $0x50] sm:$0xff]
        %v358 = vld [vmem:[#allocation8 + $0x58] sm:$0xff]
        %v359 = vld [vmem:[#allocation8 + $0x60] sm:$0xff]
        %v360 = vld [vmem:[#allocation8 + $0x68] sm:$0xff]
        %v361 = vld [vmem:[#allocation8 + $0x70] sm:$0xff]
        %v362 = vld [vmem:[#allocation8 + $0x78] sm:$0xff]
        %v363 = vld [vmem:[#allocation10] sm:$0xff]
        %v364 = vld [vmem:[#allocation10 + $0x8] sm:$0xff]
        %365 = vmatprep.subr.mxu0 0.0
        %366 = vmatpush1.msra.mxu0 %v347
        %367 = vmatprep.subr.mxu0 0.0
        %368 = vmatpush1.msra.mxu0 %v348
        %369 = vmatprep.subr.mxu0 0.0
        %370 = vmatpush1.msra.mxu0 %v349
        %371 = vmatprep.subr.mxu0 0.0
        %372 = vmatpush1.msra.mxu0 %v350
        %373 = vmatprep.subr.mxu0 0.0
        %374 = vmatpush1.msra.mxu0 %v351
        %375 = vmatprep.subr.mxu0 0.0
        %376 = vmatpush1.msra.mxu0 %v352
        %377 = vmatprep.subr.mxu0 0.0
        %378 = vmatpush1.msra.mxu0 %v353
        %379 = vmatprep.subr.mxu0 0.0
        %380 = vmatpush1.msra.mxu0 %v354
        %381 = vmatprep.subr.mxu0 0.0
        %382 = vmatpush1.msra.mxu0 %v355
        %383 = vmatprep.subr.mxu0 0.0
        %384 = vmatpush1.msra.mxu0 %v356
        %385 = vmatprep.subr.mxu0 0.0
        %386 = vmatpush1.msra.mxu0 %v357
        %387 = vmatprep.subr.mxu0 0.0
        %388 = vmatpush1.msra.mxu0 %v358
        %389 = vmatprep.subr.mxu0 0.0
        %390 = vmatpush1.msra.mxu0 %v359
        %391 = vmatprep.subr.mxu0 0.0
        %392 = vmatpush1.msra.mxu0 %v360
        %393 = vmatprep.subr.mxu0 0.0
        %394 = vmatpush1.msra.mxu0 %v361
        %395 = vmatprep.subr.mxu0 0.0
        %396 = vmatpush1.msra.mxu0 %v362
        %397 = vmatprep.subr.mxu0 0.0
        %398 = vmatpush1.msra.mxu0 0.0
        %399 = vmatprep.subr.mxu0 0.0
        %400 = vmatpush1.msra.mxu0 0.0
        %401 = vmatprep.subr.mxu0 0.0
        %402 = vmatpush1.msra.mxu0 0.0
        %403 = vmatprep.subr.mxu0 0.0
        %404 = vmatpush1.msra.mxu0 0.0
        %405 = vmatprep.subr.mxu0 0.0
        %406 = vmatpush1.msra.mxu0 0.0
        %407 = vmatprep.subr.mxu0 0.0
        %408 = vmatpush1.msra.mxu0 0.0
        %409 = vmatprep.subr.mxu0 0.0
        %410 = vmatpush1.msra.mxu0 0.0
        %411 = vmatprep.subr.mxu0 0.0
        %412 = vmatpush1.msra.mxu0 0.0
        %413 = vmatprep.subr.mxu0 0.0
        %414 = vmatpush1.msra.mxu0 0.0
        %415 = vmatprep.subr.mxu0 0.0
        %416 = vmatpush1.msra.mxu0 0.0
        %417 = vmatprep.subr.mxu0 0.0
        %418 = vmatpush1.msra.mxu0 0.0
        %419 = vmatprep.subr.mxu0 0.0
        %420 = vmatpush1.msra.mxu0 0.0
        %421 = vmatprep.subr.mxu0 0.0
        %422 = vmatpush1.msra.mxu0 0.0
        %423 = vmatprep.subr.mxu0 0.0
        %424 = vmatpush1.msra.mxu0 0.0
        %425 = vmatprep.subr.mxu0 0.0
        %426 = vmatpush1.msra.mxu0 0.0
        %427 = vmatprep.subr.mxu0 0.0
        %428 = vmatpush1.msra.mxu0 0.0
        %429 = vmatprep.mubr.f32.mxu0 0.0
        %430 = vmatmul.mubr.f32.gmra.mrb[0].mxu0 %v337
        %v431 = vpop.f32.mrb[0].mxu0
        %v432 = vadd.f32 0.0, %v431
        %v433 = vpop.f32.mrb[0].mxu0
        %434 = vmatprep.mubr.f32.mxu0 0.0
        %435 = vmatmul.mubr.f32.gmra.mrb[0].mxu0 %v338
        %v436 = vpop.f32.mrb[0].mxu0
        %v437 = vadd.f32 0.0, %v436
        %v438 = vpop.f32.mrb[0].mxu0
        %439 = vmatprep.mubr.f32.mxu0 0.0
        %440 = vmatmul.mubr.f32.gmra.mrb[0].mxu0 %v339
        %v441 = vpop.f32.mrb[0].mxu0
        %v442 = vadd.f32 0.0, %v441
        %v443 = vpop.f32.mrb[0].mxu0
        %444 = vmatprep.mubr.f32.mxu0 0.0
        %445 = vmatmul.mubr.f32.gmra.mrb[0].mxu0 %v340
        %v446 = vpop.f32.mrb[0].mxu0
        %v447 = vadd.f32 0.0, %v446
        %v448 = vpop.f32.mrb[0].mxu0
        %449 = vmatprep.mubr.f32.mxu0 0.0
        %450 = vmatmul.mubr.f32.gmra.mrb[0].mxu0 %v341
        %v451 = vpop.f32.mrb[0].mxu0
        %v452 = vadd.f32 0.0, %v451
        %v453 = vpop.f32.mrb[0].mxu0
        %454 = vmatprep.mubr.f32.mxu0 0.0
        %455 = vmatmul.mubr.f32.gmra.mrb[0].mxu0 %v342
        %v456 = vpop.f32.mrb[0].mxu0
        %v457 = vadd.f32 0.0, %v456
        %v458 = vpop.f32.mrb[0].mxu0
        %459 = vmatprep.mubr.f32.mxu0 0.0
        %460 = vmatmul.mubr.f32.gmra.mrb[0].mxu0 %v343
        %v461 = vpop.f32.mrb[0].mxu0
        %v462 = vadd.f32 0.0, %v461
        %v463 = vpop.f32.mrb[0].mxu0
        %464 = vmatprep.mubr.f32.mxu0 0.0
        %465 = vmatmul.mubr.f32.gmra.mrb[0].mxu0 %v344
        %v466 = vpop.f32.mrb[0].mxu0
        %v467 = vadd.f32 0.0, %v466
        %v468 = vpop.f32.mrb[0].mxu0
        %469 = vdwg.mxu0
        %v470 = vlaneseq
        %v471 = vand.u32 %v470, 127
        %vm472 = vcmask 130048
        %v474 = vsel %vm472, %v345, 0
        %v477 = vsel %vm472, %v346, 0
        %479 = vmatprep.subr.mxu0 0.0
        %480 = vmatpush1.msra.mxu0 %v432
        %481 = vmatprep.subr.mxu0 0.0
        %482 = vmatpush1.msra.mxu0 %v437
        %483 = vmatprep.subr.mxu0 0.0
        %484 = vmatpush1.msra.mxu0 0.0
        %485 = vmatprep.subr.mxu0 0.0
        %486 = vmatpush1.msra.mxu0 0.0
        %487 = vmatprep.subr.mxu0 0.0
        %488 = vmatpush1.msra.mxu0 0.0
        %489 = vmatprep.subr.mxu0 0.0
        %490 = vmatpush1.msra.mxu0 0.0
        %491 = vmatprep.subr.mxu0 0.0
        %492 = vmatpush1.msra.mxu0 0.0
        %493 = vmatprep.subr.mxu0 0.0
        %494 = vmatpush1.msra.mxu0 0.0
        %495 = vmatprep.subr.mxu0 0.0
        %496 = vmatpush1.msra.mxu0 0.0
        %497 = vmatprep.subr.mxu0 0.0
        %498 = vmatpush1.msra.mxu0 0.0
        %499 = vmatprep.subr.mxu0 0.0
        %500 = vmatpush1.msra.mxu0 0.0
        %501 = vmatprep.subr.mxu0 0.0
        %502 = vmatpush1.msra.mxu0 0.0
        %503 = vmatprep.subr.mxu0 0.0
        %504 = vmatpush1.msra.mxu0 0.0
        %505 = vmatprep.subr.mxu0 0.0
        %506 = vmatpush1.msra.mxu0 0.0
        %507 = vmatprep.subr.mxu0 0.0
        %508 = vmatpush1.msra.mxu0 0.0
        %509 = vmatprep.subr.mxu0 0.0
        %510 = vmatpush1.msra.mxu0 0.0
        %511 = vmatprep.subr.mxu0 0.0
        %512 = vmatpush1.msra.mxu0 0.0
        %513 = vmatprep.subr.mxu0 0.0
        %514 = vmatpush1.msra.mxu0 0.0
        %515 = vmatprep.subr.mxu0 0.0
        %516 = vmatpush1.msra.mxu0 0.0
        %517 = vmatprep.subr.mxu0 0.0
        %518 = vmatpush1.msra.mxu0 0.0
        %519 = vmatprep.subr.mxu0 0.0
        %520 = vmatpush1.msra.mxu0 0.0
        %521 = vmatprep.subr.mxu0 0.0
        %522 = vmatpush1.msra.mxu0 0.0
        %523 = vmatprep.subr.mxu0 0.0
        %524 = vmatpush1.msra.mxu0 0.0
        %525 = vmatprep.subr.mxu0 0.0
        %526 = vmatpush1.msra.mxu0 0.0
        %527 = vmatprep.subr.mxu0 0.0
        %528 = vmatpush1.msra.mxu0 0.0
        %529 = vmatprep.subr.mxu0 0.0
        %530 = vmatpush1.msra.mxu0 0.0
        %531 = vmatprep.subr.mxu0 0.0
        %532 = vmatpush1.msra.mxu0 0.0
        %533 = vmatprep.subr.mxu0 0.0
        %534 = vmatpush1.msra.mxu0 0.0
        %535 = vmatprep.subr.mxu0 0.0
        %536 = vmatpush1.msra.mxu0 0.0
        %537 = vmatprep.subr.mxu0 0.0
        %538 = vmatpush1.msra.mxu0 0.0
        %539 = vmatprep.subr.mxu0 0.0
        %540 = vmatpush1.msra.mxu0 0.0
        %541 = vmatprep.subr.mxu0 0.0
        %542 = vmatpush1.msra.mxu0 0.0
        %543 = vmatprep.mubr.f32.mxu0 0.0
        %544 = vmatmul.mubr.f32.gmra.mrb[0].mxu0 %v474
        %v545 = vpop.f32.mrb[0].mxu0
        %v546 = vadd.f32 0.0, %v545
        %v547 = vpop.f32.mrb[0].mxu0
        %548 = vmatprep.mubr.f32.mxu0 0.0
        %549 = vmatmul.mubr.f32.gmra.mrb[0].mxu0 %v477
        %v550 = vpop.f32.mrb[0].mxu0
        %v551 = vadd.f32 0.0, %v550
        %v552 = vpop.f32.mrb[0].mxu0
        %553 = vdwg.mxu0
        %v554 = vmul.f32 %v546, 0.0010405828
        %v555 = vmul.f32 %v551, 0.0010405828
        %v556 = vsub.f32 %v554, %v337
        %v557 = vsub.f32 %v555, %v338
        %v558 = vand.u32 2147483647, %v556
        %v559 = vand.u32 2147483647, %v557
        %v560 = vmul.f32 %v558, 5.0
        %v561 = vmul.f32 %v559, 5.0
        %v562 = vadd.f32 %v560, 1.0
        %v563 = vadd.f32 %v561, 1.0
        %v564 = vmul.f32 %v562, %v363
        %v565 = vmul.f32 %v563, %v364
        %v566 = vand.u32 2147483647, %v329
        %v567 = vand.u32 2147483647, %v330
        %v568 = vsub.f32 0.0, %v566
        %v569 = vsub.f32 0.0, %v567
        %v570 = vmul.f32 %v568, 1.442695
        %v571 = vpow.pop %v570
        %v572 = vmul.f32 %v569, 1.442695
        %v573 = vpow.pop %v572
        %v574 = vmax.f32 %v329, 0.0
        %v575 = vmax.f32 %v330, 0.0
        %v576 = vmul.f32 %v329, %v337
        %v577 = vmul.f32 %v330, %v338
        %v578 = vsub.f32 %v574, %v576
        %v579 = vsub.f32 %v575, %v577
        %v580 = vadd.f32 %v571, 1.0
        %v581 = vadd.f32 %v573, 1.0
        %v582 = vlog2.pop %v580
        %v583 = vmul.f32 %v582, 0.6931472
        %v584 = vlog2.pop %v581
        %v585 = vmul.f32 %v584, 0.6931472
        %v586 = vadd.f32 %v578, %v583
        %v587 = vadd.f32 %v579, %v585
        %vm588 = vcmp.ge.f32.partialorder %v329, 0.0
        %vm589 = vcmp.ge.f32.partialorder %v330, 0.0
        %v590 = vsel %vm588, 1.0, %v571
        %v591 = vsel %vm589, 1.0, %v573
        %v592 = vmul.f32 %v590, %v337
        %v593 = vmul.f32 %v591, %v338
        %v594 = vadd.f32 %v592, %v580
        %v595 = vadd.f32 %v593, %v581
        %v596 = vsub.f32 1.0, %v337
        %v597 = vsub.f32 1.0, %v338
        %v598 = vmul.f32 %v590, %v596
        %v599 = vmul.f32 %v591, %v597
        %v600 = vadd.f32 %v337, 1.0
        %v601 = vadd.f32 %v338, 1.0
        %v602 = vmul.f32 %v600, %v580
        %v603 = vmul.f32 %v601, %v581
        %v604 = vadd.f32 %v598, %v602
        %v605 = vadd.f32 %v599, %v603
        %v606 = vrcp.pop %v604
        %v607 = vrcp.pop %v605
        %v608 = vmul.f32 %v604, %v606
        %v609 = vmul.f32 %v605, %v607
        %v610 = vsub.f32 2.0, %v608
        %v611 = vsub.f32 2.0, %v609
        %v612 = vmul.f32 %v606, %v610
        %v613 = vmul.f32 %v607, %v611
        %v614 = vmul.f32 %v594, %v612
        %v615 = vmul.f32 %v595, %v613
        %v616 = vsub.f32 1.0, %v614
        %v617 = vsub.f32 1.0, %v615
        %v618 = vadd.f32 %v586, %v616
        %v619 = vadd.f32 %v587, %v617
        %v620 = vmul.f32 %v564, %v618
        %v621 = vmul.f32 %v565, %v619
        %622 = vadd.xlane.f32.xlu0 %v620
        %v623 = vpop.xlane.xlu0 %622
        %624 = vadd.xlane.f32.xlu0 %v621
        %v625 = vpop.xlane.xlu0 %624
        %v626 = vadd.f32 %v623, %v625
        %v627 = vrot.slane %v626, 4
        %v628 = vadd.f32 %v626, %v627
        %v629 = vrot.slane %v628, 2
        %v630 = vadd.f32 %v628, %v629
        %v631 = vrot.slane %v630, 1
        %v632 = vadd.f32 %v630, %v631
        %633 = vadd.xlane.f32.xlu0 %v564
        %v634 = vpop.xlane.xlu0 %633
        %635 = vadd.xlane.f32.xlu0 %v565
        %v636 = vpop.xlane.xlu0 %635
        %v637 = vadd.f32 %v634, %v636
        %v638 = vrot.slane %v637, 4
        %v639 = vadd.f32 %v637, %v638
        %v640 = vrot.slane %v639, 2
        %v641 = vadd.f32 %v639, %v640
        %v642 = vrot.slane %v641, 1
        %v643 = vadd.f32 %v641, %v642
        %vm644 = vcmp.eq.s32.totalorder %v471, 0
        %v645 = vrcp.pop %v643
        %v646 = vmul.f32 %v632, %v645
        %v647 = vsel %vm644, %v646, 0.0
        %648 = vmatprep.subr.mxu0 0.0
        %649 = vmatpush1.msra.mxu0 %v442
        %650 = vmatprep.subr.mxu0 0.0
        %651 = vmatpush1.msra.mxu0 %v447
        %652 = vmatprep.subr.mxu0 0.0
        %653 = vmatpush1.msra.mxu0 0.0
        %654 = vmatprep.subr.mxu0 0.0
        %655 = vmatpush1.msra.mxu0 0.0
        %656 = vmatprep.subr.mxu0 0.0
        %657 = vmatpush1.msra.mxu0 0.0
        %658 = vmatprep.subr.mxu0 0.0
        %659 = vmatpush1.msra.mxu0 0.0
        %660 = vmatprep.subr.mxu0 0.0
        %661 = vmatpush1.msra.mxu0 0.0
        %662 = vmatprep.subr.mxu0 0.0
        %663 = vmatpush1.msra.mxu0 0.0
        %664 = vmatprep.subr.mxu0 0.0
        %665 = vmatpush1.msra.mxu0 0.0
        %666 = vmatprep.subr.mxu0 0.0
        %667 = vmatpush1.msra.mxu0 0.0
        %668 = vmatprep.subr.mxu0 0.0
        %669 = vmatpush1.msra.mxu0 0.0
        %670 = vmatprep.subr.mxu0 0.0
        %671 = vmatpush1.msra.mxu0 0.0
        %672 = vmatprep.subr.mxu0 0.0
        %673 = vmatpush1.msra.mxu0 0.0
        %674 = vmatprep.subr.mxu0 0.0
        %675 = vmatpush1.msra.mxu0 0.0
        %676 = vmatprep.subr.mxu0 0.0
        %677 = vmatpush1.msra.mxu0 0.0
        %678 = vmatprep.subr.mxu0 0.0
        %679 = vmatpush1.msra.mxu0 0.0
        %680 = vmatprep.subr.mxu0 0.0
        %681 = vmatpush1.msra.mxu0 0.0
        %682 = vmatprep.subr.mxu0 0.0
        %683 = vmatpush1.msra.mxu0 0.0
        %684 = vmatprep.subr.mxu0 0.0
        %685 = vmatpush1.msra.mxu0 0.0
        %686 = vmatprep.subr.mxu0 0.0
        %687 = vmatpush1.msra.mxu0 0.0
        %688 = vmatprep.subr.mxu0 0.0
        %689 = vmatpush1.msra.mxu0 0.0
        %690 = vmatprep.subr.mxu0 0.0
        %691 = vmatpush1.msra.mxu0 0.0
        %692 = vmatprep.subr.mxu0 0.0
        %693 = vmatpush1.msra.mxu0 0.0
        %694 = vmatprep.subr.mxu0 0.0
        %695 = vmatpush1.msra.mxu0 0.0
        %696 = vmatprep.subr.mxu0 0.0
        %697 = vmatpush1.msra.mxu0 0.0
        %698 = vmatprep.subr.mxu0 0.0
        %699 = vmatpush1.msra.mxu0 0.0
        %700 = vmatprep.subr.mxu0 0.0
        %701 = vmatpush1.msra.mxu0 0.0
        %702 = vmatprep.subr.mxu0 0.0
        %703 = vmatpush1.msra.mxu0 0.0
        %704 = vmatprep.subr.mxu0 0.0
        %705 = vmatpush1.msra.mxu0 0.0
        %706 = vmatprep.subr.mxu0 0.0
        %707 = vmatpush1.msra.mxu0 0.0
        %708 = vmatprep.subr.mxu0 0.0
        %709 = vmatpush1.msra.mxu0 0.0
        %710 = vmatprep.subr.mxu0 0.0
        %711 = vmatpush1.msra.mxu0 0.0
        %712 = vmatprep.mubr.f32.mxu0 0.0
        %713 = vmatmul.mubr.f32.gmra.mrb[0].mxu0 %v474
        %v714 = vpop.f32.mrb[0].mxu0
        %v715 = vadd.f32 0.0, %v714
        %v716 = vpop.f32.mrb[0].mxu0
        %717 = vmatprep.mubr.f32.mxu0 0.0
        %718 = vmatmul.mubr.f32.gmra.mrb[0].mxu0 %v477
        %v719 = vpop.f32.mrb[0].mxu0
        %v720 = vadd.f32 0.0, %v719
        %v721 = vpop.f32.mrb[0].mxu0
        %722 = vdwg.mxu0
        %v723 = vmul.f32 %v715, 0.0010405828
        %v724 = vmul.f32 %v720, 0.0010405828
        %v725 = vsub.f32 %v723, %v339
        %v726 = vsub.f32 %v724, %v340
        %v727 = vand.u32 2147483647, %v725
        %v728 = vand.u32 2147483647, %v726
        %v729 = vmul.f32 %v727, 5.0
        %v730 = vmul.f32 %v728, 5.0
        %v731 = vadd.f32 %v729, 1.0
        %v732 = vadd.f32 %v730, 1.0
        %v733 = vmul.f32 %v731, %v363
        %v734 = vmul.f32 %v732, %v364
        %v735 = vand.u32 2147483647, %v331
        %v736 = vand.u32 2147483647, %v332
        %v737 = vsub.f32 0.0, %v735
        %v738 = vsub.f32 0.0, %v736
        %v739 = vmul.f32 %v737, 1.442695
        %v740 = vpow.pop %v739
        %v741 = vmul.f32 %v738, 1.442695
        %v742 = vpow.pop %v741
        %v743 = vmax.f32 %v331, 0.0
        %v744 = vmax.f32 %v332, 0.0
        %v745 = vmul.f32 %v331, %v339
        %v746 = vmul.f32 %v332, %v340
        %v747 = vsub.f32 %v743, %v745
        %v748 = vsub.f32 %v744, %v746
        %v749 = vadd.f32 %v740, 1.0
        %v750 = vadd.f32 %v742, 1.0
        %v751 = vlog2.pop %v749
        %v752 = vmul.f32 %v751, 0.6931472
        %v753 = vlog2.pop %v750
        %v754 = vmul.f32 %v753, 0.6931472
        %v755 = vadd.f32 %v747, %v752
        %v756 = vadd.f32 %v748, %v754
        %vm757 = vcmp.ge.f32.partialorder %v331, 0.0
        %vm758 = vcmp.ge.f32.partialorder %v332, 0.0
        %v759 = vsel %vm757, 1.0, %v740
        %v760 = vsel %vm758, 1.0, %v742
        %v761 = vmul.f32 %v759, %v339
        %v762 = vmul.f32 %v760, %v340
        %v763 = vadd.f32 %v761, %v749
        %v764 = vadd.f32 %v762, %v750
        %v765 = vsub.f32 1.0, %v339
        %v766 = vsub.f32 1.0, %v340
        %v767 = vmul.f32 %v759, %v765
        %v768 = vmul.f32 %v760, %v766
        %v769 = vadd.f32 %v339, 1.0
        %v770 = vadd.f32 %v340, 1.0
        %v771 = vmul.f32 %v769, %v749
        %v772 = vmul.f32 %v770, %v750
        %v773 = vadd.f32 %v767, %v771
        %v774 = vadd.f32 %v768, %v772
        %v775 = vrcp.pop %v773
        %v776 = vrcp.pop %v774
        %v777 = vmul.f32 %v773, %v775
        %v778 = vmul.f32 %v774, %v776
        %v779 = vsub.f32 2.0, %v777
        %v780 = vsub.f32 2.0, %v778
        %v781 = vmul.f32 %v775, %v779
        %v782 = vmul.f32 %v776, %v780
        %v783 = vmul.f32 %v763, %v781
        %v784 = vmul.f32 %v764, %v782
        %v785 = vsub.f32 1.0, %v783
        %v786 = vsub.f32 1.0, %v784
        %v787 = vadd.f32 %v755, %v785
        %v788 = vadd.f32 %v756, %v786
        %v789 = vmul.f32 %v733, %v787
        %v790 = vmul.f32 %v734, %v788
        %791 = vadd.xlane.f32.xlu0 %v789
        %v792 = vpop.xlane.xlu0 %791
        %793 = vadd.xlane.f32.xlu0 %v790
        %v794 = vpop.xlane.xlu0 %793
        %v795 = vadd.f32 %v792, %v794
        %v796 = vrot.slane %v795, 4
        %v797 = vadd.f32 %v795, %v796
        %v798 = vrot.slane %v797, 2
        %v799 = vadd.f32 %v797, %v798
        %v800 = vrot.slane %v799, 1
        %v801 = vadd.f32 %v799, %v800
        %802 = vadd.xlane.f32.xlu0 %v733
        %v803 = vpop.xlane.xlu0 %802
        %804 = vadd.xlane.f32.xlu0 %v734
        %v805 = vpop.xlane.xlu0 %804
        %v806 = vadd.f32 %v803, %v805
        %v807 = vrot.slane %v806, 4
        %v808 = vadd.f32 %v806, %v807
        %v809 = vrot.slane %v808, 2
        %v810 = vadd.f32 %v808, %v809
        %v811 = vrot.slane %v810, 1
        %v812 = vadd.f32 %v810, %v811
        %vm813 = vcmp.eq.s32.totalorder %v471, 1
        %v814 = vrcp.pop %v812
        %v815 = vmul.f32 %v801, %v814
        %v816 = vsel %vm813, %v815, %v647
        %817 = vmatprep.subr.mxu0 0.0
        %818 = vmatpush1.msra.mxu0 %v452
        %819 = vmatprep.subr.mxu0 0.0
        %820 = vmatpush1.msra.mxu0 %v457
        %821 = vmatprep.subr.mxu0 0.0
        %822 = vmatpush1.msra.mxu0 0.0
        %823 = vmatprep.subr.mxu0 0.0
        %824 = vmatpush1.msra.mxu0 0.0
        %825 = vmatprep.subr.mxu0 0.0
        %826 = vmatpush1.msra.mxu0 0.0
        %827 = vmatprep.subr.mxu0 0.0
        %828 = vmatpush1.msra.mxu0 0.0
        %829 = vmatprep.subr.mxu0 0.0
        %830 = vmatpush1.msra.mxu0 0.0
        %831 = vmatprep.subr.mxu0 0.0
        %832 = vmatpush1.msra.mxu0 0.0
        %833 = vmatprep.subr.mxu0 0.0
        %834 = vmatpush1.msra.mxu0 0.0
        %835 = vmatprep.subr.mxu0 0.0
        %836 = vmatpush1.msra.mxu0 0.0
        %837 = vmatprep.subr.mxu0 0.0
        %838 = vmatpush1.msra.mxu0 0.0
        %839 = vmatprep.subr.mxu0 0.0
        %840 = vmatpush1.msra.mxu0 0.0
        %841 = vmatprep.subr.mxu0 0.0
        %842 = vmatpush1.msra.mxu0 0.0
        %843 = vmatprep.subr.mxu0 0.0
        %844 = vmatpush1.msra.mxu0 0.0
        %845 = vmatprep.subr.mxu0 0.0
        %846 = vmatpush1.msra.mxu0 0.0
        %847 = vmatprep.subr.mxu0 0.0
        %848 = vmatpush1.msra.mxu0 0.0
        %849 = vmatprep.subr.mxu0 0.0
        %850 = vmatpush1.msra.mxu0 0.0
        %851 = vmatprep.subr.mxu0 0.0
        %852 = vmatpush1.msra.mxu0 0.0
        %853 = vmatprep.subr.mxu0 0.0
        %854 = vmatpush1.msra.mxu0 0.0
        %855 = vmatprep.subr.mxu0 0.0
        %856 = vmatpush1.msra.mxu0 0.0
        %857 = vmatprep.subr.mxu0 0.0
        %858 = vmatpush1.msra.mxu0 0.0
        %859 = vmatprep.subr.mxu0 0.0
        %860 = vmatpush1.msra.mxu0 0.0
        %861 = vmatprep.subr.mxu0 0.0
        %862 = vmatpush1.msra.mxu0 0.0
        %863 = vmatprep.subr.mxu0 0.0
        %864 = vmatpush1.msra.mxu0 0.0
        %865 = vmatprep.subr.mxu0 0.0
        %866 = vmatpush1.msra.mxu0 0.0
        %867 = vmatprep.subr.mxu0 0.0
        %868 = vmatpush1.msra.mxu0 0.0
        %869 = vmatprep.subr.mxu0 0.0
        %870 = vmatpush1.msra.mxu0 0.0
        %871 = vmatprep.subr.mxu0 0.0
        %872 = vmatpush1.msra.mxu0 0.0
        %873 = vmatprep.subr.mxu0 0.0
        %874 = vmatpush1.msra.mxu0 0.0
        %875 = vmatprep.subr.mxu0 0.0
        %876 = vmatpush1.msra.mxu0 0.0
        %877 = vmatprep.subr.mxu0 0.0
        %878 = vmatpush1.msra.mxu0 0.0
        %879 = vmatprep.subr.mxu0 0.0
        %880 = vmatpush1.msra.mxu0 0.0
        %881 = vmatprep.mubr.f32.mxu0 0.0
        %882 = vmatmul.mubr.f32.gmra.mrb[0].mxu0 %v474
        %v883 = vpop.f32.mrb[0].mxu0
        %v884 = vadd.f32 0.0, %v883
        %v885 = vpop.f32.mrb[0].mxu0
        %886 = vmatprep.mubr.f32.mxu0 0.0
        %887 = vmatmul.mubr.f32.gmra.mrb[0].mxu0 %v477
        %v888 = vpop.f32.mrb[0].mxu0
        %v889 = vadd.f32 0.0, %v888
        %v890 = vpop.f32.mrb[0].mxu0
        %891 = vdwg.mxu0
        %v892 = vmul.f32 %v884, 0.0010405828
        %v893 = vmul.f32 %v889, 0.0010405828
        %v894 = vsub.f32 %v892, %v341
        %v895 = vsub.f32 %v893, %v342
        %v896 = vand.u32 2147483647, %v894
        %v897 = vand.u32 2147483647, %v895
        %v898 = vmul.f32 %v896, 5.0
        %v899 = vmul.f32 %v897, 5.0
        %v900 = vadd.f32 %v898, 1.0
        %v901 = vadd.f32 %v899, 1.0
        %v902 = vmul.f32 %v900, %v363
        %v903 = vmul.f32 %v901, %v364
        %v904 = vand.u32 2147483647, %v333
        %v905 = vand.u32 2147483647, %v334
        %v906 = vsub.f32 0.0, %v904
        %v907 = vsub.f32 0.0, %v905
        %v908 = vmul.f32 %v906, 1.442695
        %v909 = vpow.pop %v908
        %v910 = vmul.f32 %v907, 1.442695
        %v911 = vpow.pop %v910
        %v912 = vmax.f32 %v333, 0.0
        %v913 = vmax.f32 %v334, 0.0
        %v914 = vmul.f32 %v333, %v341
        %v915 = vmul.f32 %v334, %v342
        %v916 = vsub.f32 %v912, %v914
        %v917 = vsub.f32 %v913, %v915
        %v918 = vadd.f32 %v909, 1.0
        %v919 = vadd.f32 %v911, 1.0
        %v920 = vlog2.pop %v918
        %v921 = vmul.f32 %v920, 0.6931472
        %v922 = vlog2.pop %v919
        %v923 = vmul.f32 %v922, 0.6931472
        %v924 = vadd.f32 %v916, %v921
        %v925 = vadd.f32 %v917, %v923
        %vm926 = vcmp.ge.f32.partialorder %v333, 0.0
        %vm927 = vcmp.ge.f32.partialorder %v334, 0.0
        %v928 = vsel %vm926, 1.0, %v909
        %v929 = vsel %vm927, 1.0, %v911
        %v930 = vmul.f32 %v928, %v341
        %v931 = vmul.f32 %v929, %v342
        %v932 = vadd.f32 %v930, %v918
        %v933 = vadd.f32 %v931, %v919
        %v934 = vsub.f32 1.0, %v341
        %v935 = vsub.f32 1.0, %v342
        %v936 = vmul.f32 %v928, %v934
        %v937 = vmul.f32 %v929, %v935
        %v938 = vadd.f32 %v341, 1.0
        %v939 = vadd.f32 %v342, 1.0
        %v940 = vmul.f32 %v938, %v918
        %v941 = vmul.f32 %v939, %v919
        %v942 = vadd.f32 %v936, %v940
        %v943 = vadd.f32 %v937, %v941
        %v944 = vrcp.pop %v942
        %v945 = vrcp.pop %v943
        %v946 = vmul.f32 %v942, %v944
        %v947 = vmul.f32 %v943, %v945
        %v948 = vsub.f32 2.0, %v946
        %v949 = vsub.f32 2.0, %v947
        %v950 = vmul.f32 %v944, %v948
        %v951 = vmul.f32 %v945, %v949
        %v952 = vmul.f32 %v932, %v950
        %v953 = vmul.f32 %v933, %v951
        %v954 = vsub.f32 1.0, %v952
        %v955 = vsub.f32 1.0, %v953
        %v956 = vadd.f32 %v924, %v954
        %v957 = vadd.f32 %v925, %v955
        %v958 = vmul.f32 %v902, %v956
        %v959 = vmul.f32 %v903, %v957
        %960 = vadd.xlane.f32.xlu0 %v958
        %v961 = vpop.xlane.xlu0 %960
        %962 = vadd.xlane.f32.xlu0 %v959
        %v963 = vpop.xlane.xlu0 %962
        %v964 = vadd.f32 %v961, %v963
        %v965 = vrot.slane %v964, 4
        %v966 = vadd.f32 %v964, %v965
        %v967 = vrot.slane %v966, 2
        %v968 = vadd.f32 %v966, %v967
        %v969 = vrot.slane %v968, 1
        %v970 = vadd.f32 %v968, %v969
        %971 = vadd.xlane.f32.xlu0 %v902
        %v972 = vpop.xlane.xlu0 %971
        %973 = vadd.xlane.f32.xlu0 %v903
        %v974 = vpop.xlane.xlu0 %973
        %v975 = vadd.f32 %v972, %v974
        %v976 = vrot.slane %v975, 4
        %v977 = vadd.f32 %v975, %v976
        %v978 = vrot.slane %v977, 2
        %v979 = vadd.f32 %v977, %v978
        %v980 = vrot.slane %v979, 1
        %v981 = vadd.f32 %v979, %v980
        %vm982 = vcmp.eq.s32.totalorder %v471, 2
        %v983 = vrcp.pop %v981
        %v984 = vmul.f32 %v970, %v983
        %v985 = vsel %vm982, %v984, %v816
        %986 = vmatprep.subr.mxu0 0.0
        %987 = vmatpush1.msra.mxu0 %v462
        %988 = vmatprep.subr.mxu0 0.0
        %989 = vmatpush1.msra.mxu0 %v467
        %990 = vmatprep.subr.mxu0 0.0
        %991 = vmatpush1.msra.mxu0 0.0
        %992 = vmatprep.subr.mxu0 0.0
        %993 = vmatpush1.msra.mxu0 0.0
        %994 = vmatprep.subr.mxu0 0.0
        %995 = vmatpush1.msra.mxu0 0.0
        %996 = vmatprep.subr.mxu0 0.0
        %997 = vmatpush1.msra.mxu0 0.0
        %998 = vmatprep.subr.mxu0 0.0
        %999 = vmatpush1.msra.mxu0 0.0
        %1000 = vmatprep.subr.mxu0 0.0
        %1001 = vmatpush1.msra.mxu0 0.0
        %1002 = vmatprep.subr.mxu0 0.0
        %1003 = vmatpush1.msra.mxu0 0.0
        %1004 = vmatprep.subr.mxu0 0.0
        %1005 = vmatpush1.msra.mxu0 0.0
        %1006 = vmatprep.subr.mxu0 0.0
        %1007 = vmatpush1.msra.mxu0 0.0
        %1008 = vmatprep.subr.mxu0 0.0
        %1009 = vmatpush1.msra.mxu0 0.0
        %1010 = vmatprep.subr.mxu0 0.0
        %1011 = vmatpush1.msra.mxu0 0.0
        %1012 = vmatprep.subr.mxu0 0.0
        %1013 = vmatpush1.msra.mxu0 0.0
        %1014 = vmatprep.subr.mxu0 0.0
        %1015 = vmatpush1.msra.mxu0 0.0
        %1016 = vmatprep.subr.mxu0 0.0
        %1017 = vmatpush1.msra.mxu0 0.0
        %1018 = vmatprep.subr.mxu0 0.0
        %1019 = vmatpush1.msra.mxu0 0.0
        %1020 = vmatprep.subr.mxu0 0.0
        %1021 = vmatpush1.msra.mxu0 0.0
        %1022 = vmatprep.subr.mxu0 0.0
        %1023 = vmatpush1.msra.mxu0 0.0
        %1024 = vmatprep.subr.mxu0 0.0
        %1025 = vmatpush1.msra.mxu0 0.0
        %1026 = vmatprep.subr.mxu0 0.0
        %1027 = vmatpush1.msra.mxu0 0.0
        %1028 = vmatprep.subr.mxu0 0.0
        %1029 = vmatpush1.msra.mxu0 0.0
        %1030 = vmatprep.subr.mxu0 0.0
        %1031 = vmatpush1.msra.mxu0 0.0
        %1032 = vmatprep.subr.mxu0 0.0
        %1033 = vmatpush1.msra.mxu0 0.0
        %1034 = vmatprep.subr.mxu0 0.0
        %1035 = vmatpush1.msra.mxu0 0.0
        %1036 = vmatprep.subr.mxu0 0.0
        %1037 = vmatpush1.msra.mxu0 0.0
        %1038 = vmatprep.subr.mxu0 0.0
        %1039 = vmatpush1.msra.mxu0 0.0
        %1040 = vmatprep.subr.mxu0 0.0
        %1041 = vmatpush1.msra.mxu0 0.0
        %1042 = vmatprep.subr.mxu0 0.0
        %1043 = vmatpush1.msra.mxu0 0.0
        %1044 = vmatprep.subr.mxu0 0.0
        %1045 = vmatpush1.msra.mxu0 0.0
        %1046 = vmatprep.subr.mxu0 0.0
        %1047 = vmatpush1.msra.mxu0 0.0
        %1048 = vmatprep.subr.mxu0 0.0
        %1049 = vmatpush1.msra.mxu0 0.0
        %1050 = vmatprep.mubr.f32.mxu0 0.0
        %1051 = vmatmul.mubr.f32.gmra.mrb[0].mxu0 %v474
        %v1052 = vpop.f32.mrb[0].mxu0
        %v1053 = vadd.f32 0.0, %v1052
        %v1054 = vpop.f32.mrb[0].mxu0
        %1055 = vmatprep.mubr.f32.mxu0 0.0
        %1056 = vmatmul.mubr.f32.gmra.mrb[0].mxu0 %v477
        %v1057 = vpop.f32.mrb[0].mxu0
        %v1058 = vadd.f32 0.0, %v1057
        %v1059 = vpop.f32.mrb[0].mxu0
        %1060 = vdwg.mxu0
        %v1061 = vmul.f32 %v1053, 0.0010405828
        %v1062 = vmul.f32 %v1058, 0.0010405828
        %v1063 = vsub.f32 %v1061, %v343
        %v1064 = vsub.f32 %v1062, %v344
        %v1065 = vand.u32 2147483647, %v1063
        %v1066 = vand.u32 2147483647, %v1064
        %v1067 = vmul.f32 %v1065, 5.0
        %v1068 = vmul.f32 %v1066, 5.0
        %v1069 = vadd.f32 %v1067, 1.0
        %v1070 = vadd.f32 %v1068, 1.0
        %v1071 = vmul.f32 %v1069, %v363
        %v1072 = vmul.f32 %v1070, %v364
        %v1073 = vand.u32 2147483647, %v335
        %v1074 = vand.u32 2147483647, %v336
        %v1075 = vsub.f32 0.0, %v1073
        %v1076 = vsub.f32 0.0, %v1074
        %v1077 = vmul.f32 %v1075, 1.442695
        %v1078 = vpow.pop %v1077
        %v1079 = vmul.f32 %v1076, 1.442695
        %v1080 = vpow.pop %v1079
        %v1081 = vmax.f32 %v335, 0.0
        %v1082 = vmax.f32 %v336, 0.0
        %v1083 = vmul.f32 %v335, %v343
        %v1084 = vmul.f32 %v336, %v344
        %v1085 = vsub.f32 %v1081, %v1083
        %v1086 = vsub.f32 %v1082, %v1084
        %v1087 = vadd.f32 %v1078, 1.0
        %v1088 = vadd.f32 %v1080, 1.0
        %v1089 = vlog2.pop %v1087
        %v1090 = vmul.f32 %v1089, 0.6931472
        %v1091 = vlog2.pop %v1088
        %v1092 = vmul.f32 %v1091, 0.6931472
        %v1093 = vadd.f32 %v1085, %v1090
        %v1094 = vadd.f32 %v1086, %v1092
        %vm1095 = vcmp.ge.f32.partialorder %v335, 0.0
        %vm1096 = vcmp.ge.f32.partialorder %v336, 0.0
        %v1097 = vsel %vm1095, 1.0, %v1078
        %v1098 = vsel %vm1096, 1.0, %v1080
        %v1099 = vmul.f32 %v1097, %v343
        %v1100 = vmul.f32 %v1098, %v344
        %v1101 = vadd.f32 %v1099, %v1087
        %v1102 = vadd.f32 %v1100, %v1088
        %v1103 = vsub.f32 1.0, %v343
        %v1104 = vsub.f32 1.0, %v344
        %v1105 = vmul.f32 %v1097, %v1103
        %v1106 = vmul.f32 %v1098, %v1104
        %v1107 = vadd.f32 %v343, 1.0
        %v1108 = vadd.f32 %v344, 1.0
        %v1109 = vmul.f32 %v1107, %v1087
        %v1110 = vmul.f32 %v1108, %v1088
        %v1111 = vadd.f32 %v1105, %v1109
        %v1112 = vadd.f32 %v1106, %v1110
        %v1113 = vrcp.pop %v1111
        %v1114 = vrcp.pop %v1112
        %v1115 = vmul.f32 %v1111, %v1113
        %v1116 = vmul.f32 %v1112, %v1114
        %v1117 = vsub.f32 2.0, %v1115
        %v1118 = vsub.f32 2.0, %v1116
        %v1119 = vmul.f32 %v1113, %v1117
        %v1120 = vmul.f32 %v1114, %v1118
        %v1121 = vmul.f32 %v1101, %v1119
        %v1122 = vmul.f32 %v1102, %v1120
        %v1123 = vsub.f32 1.0, %v1121
        %v1124 = vsub.f32 1.0, %v1122
        %v1125 = vadd.f32 %v1093, %v1123
        %v1126 = vadd.f32 %v1094, %v1124
        %v1127 = vmul.f32 %v1071, %v1125
        %v1128 = vmul.f32 %v1072, %v1126
        %1129 = vadd.xlane.f32.xlu0 %v1127
        %v1130 = vpop.xlane.xlu0 %1129
        %1131 = vadd.xlane.f32.xlu0 %v1128
        %v1132 = vpop.xlane.xlu0 %1131
        %v1133 = vadd.f32 %v1130, %v1132
        %v1134 = vrot.slane %v1133, 4
        %v1135 = vadd.f32 %v1133, %v1134
        %v1136 = vrot.slane %v1135, 2
        %v1137 = vadd.f32 %v1135, %v1136
        %v1138 = vrot.slane %v1137, 1
        %v1139 = vadd.f32 %v1137, %v1138
        %1140 = vadd.xlane.f32.xlu0 %v1071
        %v1141 = vpop.xlane.xlu0 %1140
        %1142 = vadd.xlane.f32.xlu0 %v1072
        %v1143 = vpop.xlane.xlu0 %1142
        %v1144 = vadd.f32 %v1141, %v1143
        %v1145 = vrot.slane %v1144, 4
        %v1146 = vadd.f32 %v1144, %v1145
        %v1147 = vrot.slane %v1146, 2
        %v1148 = vadd.f32 %v1146, %v1147
        %v1149 = vrot.slane %v1148, 1
        %v1150 = vadd.f32 %v1148, %v1149
        %vm1151 = vcmp.eq.s32.totalorder %v471, 3
        %v1152 = vrcp.pop %v1150
        %v1153 = vmul.f32 %v1139, %v1152
        %v1154 = vsel %vm1151, %v1153, %v985
        %vm1155 = vcmask 24576
        %1156 = vst.msk [vmem:[%s326] sm:$0x1] %vm1155, %v1154
        %s1157 = sand.u32 %s149, 1
        %s1158 = scalar_lea.sflag [#allocation4], %s1157
        %s1159 = sand.u32 %s149, 1
        %s1160 = scalar_lea.vmem [#allocation11], %s1159
        // Predicated region
        $region61: #{tpu_custom_call.1} parent=39 // pred_check
          %p1161 = pneg %p159
        $region62: #{tpu_custom_call.1} parent=39 // pred_check_branch
          %1163 = sbr.rel (%p1161) target = $region64
        $region63: #{tpu_custom_call.1} parent=39 // pred_region
          %s1165 = ssub.s32 16, 16
          %1166 = vsyncadd %s1158, %s1165
          %s1167 = smul.addr %s26, 16
          %s1168 = scalar_lea.hbm %s5, %s1167
          %s1170 = sshll.u32 %s1160, 4
          %s1171 = int_to_ptr.vmem [resolvable:$true] %s1170
          %1173 = dma.vmem_to_hbm [thread:$0]  %s1171, 16, %s1168, %s1158
        $region64: #{tpu_custom_call.1} parent=39 // pred_fallthru
          _
      $region40: #{tpu_custom_call.1} parent=5 // pred_fallthru
        _
      %p1174 = scmp.le.s32.totalorder 2, %s21
      // Predicated region
      $region65: #{tpu_custom_call.1} parent=5 // pred_check
        %p1175 = pneg %p1174
      $region66: #{tpu_custom_call.1} parent=5 // pred_check_branch
        %1177 = sbr.rel (%p1175) target = $region68
      $region67: #{tpu_custom_call.1} parent=5 // pred_region
        %s1178 = ssub.s32 %s21, 2
        // Predicated region
        $region69: #{tpu_custom_call.1} parent=67 // pred_check
          %p1179 = pneg %p165
        $region70: #{tpu_custom_call.1} parent=67 // pred_check_branch
          %1181 = sbr.rel (%p1179) target = $region72
        $region71: #{tpu_custom_call.1} parent=67 // pred_region
          %s1182 = sand.u32 %s150, 1
          %s1183 = scalar_lea.sflag [#allocation4], %s1182
          %s1184 = sand.u32 %s150, 1
          %s1185 = scalar_lea.vmem [#allocation11], %s1184
          %1186 = dma.done %s1183, 16
        $region72: #{tpu_custom_call.1} parent=67 // pred_fallthru
          _
      $region68: #{tpu_custom_call.1} parent=5 // pred_fallthru
        _
    $region6: #{tpu_custom_call.1} parent=1 // loop_footer
      %s25 = sadd.s32 1, %s21
    $region7: #{tpu_custom_call.1} parent=1 // loop_footer_branch
      %20 = sbr.rel target = $region3
    $region8: #{tpu_custom_call.1} parent=1 // loop_exit
      _
    %1187 = vsyncpa [#allocation3], 1
    %s1188 = scalar_lea.sflag [#allocation3], 1
    %1189 = vsyncpa %s1188, 1
    %1190 = vsyncpa [#allocation6], 1
    %s1191 = scalar_lea.sflag [#allocation6], 1
    %1192 = vsyncpa %s1191, 1
    %1193 = vsyncpa [#allocation9], 1
    %1194 = vsyncpa [#allocation4], 1
    %s1195 = scalar_lea.sflag [#allocation4], 1
    %1196 = vsyncpa %s1195, 1

</llo_original>
